<compile_context>
chip_gen: v7x
topology: tpu7x:2x2x1
jax: 0.10.0
libtpu: 0.0.40
codegen_flags: <defaults>
</compile_context>

<pallas_src>
import functools

import jax
import jax.numpy as jnp
from jax.experimental import pallas as pl
from jax.experimental.pallas import tpu as pltpu


def _topk_mask_kernel(x_ref, o_ref, *, k: int, value_bits: int, idx_bits: int):
    """x_ref/o_ref: (bt, S, D) tile; CLS token at sequence position 0.

    Per (batch, channel) column: keep the k largest-|x| entries among rows
    1..S-1 (ties -> smallest row), zero the rest, pass row 0 through.
    """
    x = x_ref[...]
    bt, s, d = x.shape

    # |x| bit pattern as int32 (sign bit clear => integer order == float order).
    absx = jnp.abs(x).astype(jnp.float32)
    bits = pltpu.bitcast(absx, jnp.int32)                       # (bt, S, D), >= 0

    row = jax.lax.broadcasted_iota(jnp.int32, (bt, s, d), 1)
    is_cls = row == 0
    bits = jnp.where(is_cls, jnp.int32(-1), bits)               # CLS never competes

    # ---- stage 1: exact per-column k-th largest |x| bit pattern (radix) -----
    # Invariant: count(bits >= prefix) >= k.  Fully unrolled static loop.
    prefix = jnp.zeros((bt, 1, d), jnp.int32)
    for j in range(value_bits):
        cand = prefix | (1 << (30 - j))
        cnt = jnp.sum((bits >= cand).astype(jnp.int32), axis=1, keepdims=True)
        prefix = jnp.where(cnt >= k, cand, prefix)
    vk = prefix                                                  # (bt, 1, D)

    gt = bits > vk
    tied = bits == vk
    need = k - jnp.sum(gt.astype(jnp.int32), axis=1, keepdims=True)   # >= 1

    # ---- stage 2: break ties at the threshold toward the smallest index -----
    # Among tied entries pick the `need` with the largest ikey (= smallest row).
    s_ceil = 1 << idx_bits
    ikey = jnp.where(tied, (s_ceil - 1) - row, jnp.int32(-1))
    tprefix = jnp.zeros((bt, 1, d), jnp.int32)
    for j in range(idx_bits):
        cand = tprefix | (1 << (idx_bits - 1 - j))
        cnt = jnp.sum((ikey >= cand).astype(jnp.int32), axis=1, keepdims=True)
        tprefix = jnp.where(cnt >= need, cand, tprefix)

    keep = is_cls | gt | (tied & (ikey >= tprefix))              # exactly k + CLS
    o_ref[...] = jnp.where(keep, x, jnp.zeros((), x.dtype))


def topk_layer(x: jax.Array, topk: float) -> jax.Array:
    """Pallas implementation of TopkLayerNoCLStopk.forward.  x: [b, gh*gw+1, d]."""
    n, hw1, d = x.shape
    if topk >= 1.0:
        return x
    hw = hw1 - 1                                   # CLS token excluded from top-k
    k = max(1, int(hw * topk))

    # bf16 values convert to f32 patterns with the low 16 bits zero -> a 15-bit
    # radix is exact; generic floats use the full 31 bits of the abs pattern.
    value_bits = 15 if x.dtype == jnp.bfloat16 else 31
    idx_bits = max(1, (hw1 - 1).bit_length())

    # Batch tile: largest divisor of n whose single f32 tile is <= ~1.5 MiB so
    # double-buffered in/out plus the kernel's f32/i32 intermediates stay far
    # below the 32 MiB default scoped VMEM (safe on v5e/v6e 128 MiB and on
    # v7x's 64 MiB alike), while amortizing per-grid-step overhead.
    tile_cap_bytes = 3 * 1024 * 1024 // 2
    per_batch_f32 = hw1 * d * 4
    bt = 1
    for cand in range(1, n + 1):
        if n % cand == 0 and cand * per_batch_f32 <= tile_cap_bytes:
            bt = cand

    kernel = functools.partial(
        _topk_mask_kernel, k=k, value_bits=value_bits, idx_bits=idx_bits)

    itemsize = x.dtype.itemsize
    cost = pl.CostEstimate(
        flops=3 * (value_bits + idx_bits + 8) * n * hw1 * d,
        transcendentals=0,
        bytes_accessed=2 * n * hw1 * d * itemsize)

    return pl.pallas_call(
        kernel,
        out_shape=jax.ShapeDtypeStruct((n, hw1, d), x.dtype),
        grid=(n // bt,),
        in_specs=[pl.BlockSpec((bt, hw1, d), lambda i: (i, 0, 0))],
        out_specs=pl.BlockSpec((bt, hw1, d), lambda i: (i, 0, 0)),
        compiler_params=pltpu.CompilerParams(
            dimension_semantics=("parallel",)),    # batch axis -> v7x megacore
        cost_estimate=cost,
    )(x)


# ----------------------------- references ----------------------------------


def topk_layer_ref(x: jax.Array, topk: float) -> jax.Array:
    """Pure-JAX mirror of the PyTorch module (top_k + scatter)."""
    if topk >= 1.0:
        return x
    x_cls, x_others = x[:, :1], x[:, 1:]
    n, hw, d = x_others.shape
    k = max(1, int(hw * topk))
    xt = jnp.transpose(x_others, (0, 2, 1))                 # [n, d, hw]
    _, idx = jax.lax.top_k(jnp.abs(xt), k)
    bi = jnp.arange(n)[:, None, None]
    di = jnp.arange(d)[None, :, None]
    mask_t = jnp.zeros_like(xt).at[bi, di, idx].set(1)
    mask = jnp.transpose(mask_t, (0, 2, 1))                 # [n, hw, d]
    return jnp.concatenate([x_cls, mask * x_others], axis=1)


def topk_layer_ref_exact(x: jax.Array, topk: float) -> jax.Array:
    """Tie-break-exact reference (ties broken toward the smallest token index)."""
    if topk >= 1.0:
        return x
    x_cls, x_others = x[:, :1], x[:, 1:]
    n, hw, d = x_others.shape
    k = max(1, int(hw * topk))
    a = jnp.abs(x_others).astype(jnp.float32)               # [n, hw, d]
    ai = a[:, :, None, :]                                    # self  (axis 1 = i)
    aj = a[:, None, :, :]                                    # other (axis 2 = j)
    j_before_i = (jnp.arange(hw)[None, :] < jnp.arange(hw)[:, None])[None, :, :, None]
    beats = (aj > ai) | ((aj == ai) & j_before_i)            # [n, i, j, d]
    rank = jnp.sum(beats, axis=2)                            # [n, hw, d]
    sparse = jnp.where(rank < k, x_others, jnp.zeros((), x.dtype))
    return jnp.concatenate([x_cls, sparse], axis=1)


if __name__ == "__main__":
    # ViT-style small shapes: batch=2, gh=gw=4 -> seq = 4*4 + 1 = 17 (incl. CLS), d=32
    key = jax.random.PRNGKey(0)
    x = jax.random.normal(key, (2, 17, 32), dtype=jnp.float32)
    topk = 0.5                               # keep k = max(1, int(16*0.5)) = 8 of 16 patch tokens

    out = jax.block_until_ready(topk_layer(x, topk))
    assert out.shape == x.shape and out.dtype == x.dtype
    assert jnp.array_equal(out[:, 0], x[:, 0]), "CLS token must pass through"
    ref = topk_layer_ref(x, topk)
    assert jnp.allclose(out, ref, atol=1e-6), "f32 mismatch vs reference"

    # bf16 path (15-bit value radix); compare against the tie-break-exact reference.
    xb = x.astype(jnp.bfloat16)
    outb = jax.block_until_ready(topk_layer(xb, topk))
    refb = topk_layer_ref_exact(xb, topk)
    assert outb.dtype == jnp.bfloat16
    assert jnp.array_equal(outb, refb), "bf16 mismatch vs exact reference"

    # topk >= 1.0: identity path
    out_id = jax.block_until_ready(topk_layer(x, 1.0))
    assert jnp.array_equal(out_id, x)

    print("KERNEL_OK")
</pallas_src>

<mosaic_0001>
module attributes {stable_mosaic.version = 11 : i64} {
  func.func @_topk_mask_kernel(%arg0: i32, %arg1: memref<2x17x32xf32, #tpu.memory_space<vmem>>, %arg2: memref<2x17x32xf32, #tpu.memory_space<vmem>>) attributes {dimension_semantics = [#tpu.dimension_semantics<parallel>], iteration_bounds = array<i64: 1>, scalar_prefetch = 0 : i64, scratch_operands = 0 : i64, tpu.core_type = #tpu.core_type<tc>, window_params = [{transform_indices = @transform_0, window_bounds = array<i64: 2, 17, 32>}, {transform_indices = @transform_1, window_bounds = array<i64: 2, 17, 32>}]} {
    %c0 = arith.constant 0 : index
    %c0_0 = arith.constant 0 : index
    %c0_1 = arith.constant 0 : index
    %0 = vector.load %arg1[%c0, %c0_0, %c0_1] : memref<2x17x32xf32, #tpu.memory_space<vmem>>, vector<2x17x32xf32>
    %1 = math.absf %0 : vector<2x17x32xf32>
    %2 = tpu.bitcast %1 : vector<2x17x32xf32> -> vector<2x17x32xi32>
    %3 = tpu.iota {dimensions = array<i32: 1>} : vector<2x17x32xi32>
    %c0_i32 = arith.constant 0 : i32
    %4 = vector.broadcast %c0_i32 : i32 to vector<2x17x32xi32>
    %5 = arith.cmpi eq, %3, %4 : vector<2x17x32xi32>
    %c-1_i32 = arith.constant -1 : i32
    %6 = vector.broadcast %c-1_i32 : i32 to vector<2x17x32xi32>
    %7 = arith.select %5, %6, %2 : vector<2x17x32xi1>, vector<2x17x32xi32>
    %c0_i32_2 = arith.constant 0 : i32
    %8 = vector.broadcast %c0_i32_2 : i32 to vector<2x1x32xi32>
    %c1073741824_i32 = arith.constant 1073741824 : i32
    %9 = vector.broadcast %c1073741824_i32 : i32 to vector<2x1x32xi32>
    %10 = arith.ori %8, %9 : vector<2x1x32xi32>
    %11 = vector.broadcast %10 : vector<2x1x32xi32> to vector<2x17x32xi32>
    %12 = arith.cmpi sge, %7, %11 : vector<2x17x32xi32>
    %13 = arith.extui %12 : vector<2x17x32xi1> to vector<2x17x32xi32>
    %cst = arith.constant dense<0> : vector<2x32xi32>
    %14 = vector.multi_reduction <add>, %13, %cst [1] : vector<2x17x32xi32> to vector<2x32xi32>
    %15 = vector.shape_cast %14 : vector<2x32xi32> to vector<2x1x32xi32>
    %c8_i32 = arith.constant 8 : i32
    %16 = vector.broadcast %c8_i32 : i32 to vector<2x1x32xi32>
    %17 = arith.cmpi sge, %15, %16 : vector<2x1x32xi32>
    %18 = arith.select %17, %10, %8 : vector<2x1x32xi1>, vector<2x1x32xi32>
    %c536870912_i32 = arith.constant 536870912 : i32
    %19 = vector.broadcast %c536870912_i32 : i32 to vector<2x1x32xi32>
    %20 = arith.ori %18, %19 : vector<2x1x32xi32>
    %21 = vector.broadcast %20 : vector<2x1x32xi32> to vector<2x17x32xi32>
    %22 = arith.cmpi sge, %7, %21 : vector<2x17x32xi32>
    %23 = arith.extui %22 : vector<2x17x32xi1> to vector<2x17x32xi32>
    %cst_3 = arith.constant dense<0> : vector<2x32xi32>
    %24 = vector.multi_reduction <add>, %23, %cst_3 [1] : vector<2x17x32xi32> to vector<2x32xi32>
    %25 = vector.shape_cast %24 : vector<2x32xi32> to vector<2x1x32xi32>
    %c8_i32_4 = arith.constant 8 : i32
    %26 = vector.broadcast %c8_i32_4 : i32 to vector<2x1x32xi32>
    %27 = arith.cmpi sge, %25, %26 : vector<2x1x32xi32>
    %28 = arith.select %27, %20, %18 : vector<2x1x32xi1>, vector<2x1x32xi32>
    %c268435456_i32 = arith.constant 268435456 : i32
    %29 = vector.broadcast %c268435456_i32 : i32 to vector<2x1x32xi32>
    %30 = arith.ori %28, %29 : vector<2x1x32xi32>
    %31 = vector.broadcast %30 : vector<2x1x32xi32> to vector<2x17x32xi32>
    %32 = arith.cmpi sge, %7, %31 : vector<2x17x32xi32>
    %33 = arith.extui %32 : vector<2x17x32xi1> to vector<2x17x32xi32>
    %cst_5 = arith.constant dense<0> : vector<2x32xi32>
    %34 = vector.multi_reduction <add>, %33, %cst_5 [1] : vector<2x17x32xi32> to vector<2x32xi32>
    %35 = vector.shape_cast %34 : vector<2x32xi32> to vector<2x1x32xi32>
    %c8_i32_6 = arith.constant 8 : i32
    %36 = vector.broadcast %c8_i32_6 : i32 to vector<2x1x32xi32>
    %37 = arith.cmpi sge, %35, %36 : vector<2x1x32xi32>
    %38 = arith.select %37, %30, %28 : vector<2x1x32xi1>, vector<2x1x32xi32>
    %c134217728_i32 = arith.constant 134217728 : i32
    %39 = vector.broadcast %c134217728_i32 : i32 to vector<2x1x32xi32>
    %40 = arith.ori %38, %39 : vector<2x1x32xi32>
    %41 = vector.broadcast %40 : vector<2x1x32xi32> to vector<2x17x32xi32>
    %42 = arith.cmpi sge, %7, %41 : vector<2x17x32xi32>
    %43 = arith.extui %42 : vector<2x17x32xi1> to vector<2x17x32xi32>
    %cst_7 = arith.constant dense<0> : vector<2x32xi32>
    %44 = vector.multi_reduction <add>, %43, %cst_7 [1] : vector<2x17x32xi32> to vector<2x32xi32>
    %45 = vector.shape_cast %44 : vector<2x32xi32> to vector<2x1x32xi32>
    %c8_i32_8 = arith.constant 8 : i32
    %46 = vector.broadcast %c8_i32_8 : i32 to vector<2x1x32xi32>
    %47 = arith.cmpi sge, %45, %46 : vector<2x1x32xi32>
    %48 = arith.select %47, %40, %38 : vector<2x1x32xi1>, vector<2x1x32xi32>
    %c67108864_i32 = arith.constant 67108864 : i32
    %49 = vector.broadcast %c67108864_i32 : i32 to vector<2x1x32xi32>
    %50 = arith.ori %48, %49 : vector<2x1x32xi32>
    %51 = vector.broadcast %50 : vector<2x1x32xi32> to vector<2x17x32xi32>
    %52 = arith.cmpi sge, %7, %51 : vector<2x17x32xi32>
    %53 = arith.extui %52 : vector<2x17x32xi1> to vector<2x17x32xi32>
    %cst_9 = arith.constant dense<0> : vector<2x32xi32>
    %54 = vector.multi_reduction <add>, %53, %cst_9 [1] : vector<2x17x32xi32> to vector<2x32xi32>
    %55 = vector.shape_cast %54 : vector<2x32xi32> to vector<2x1x32xi32>
    %c8_i32_10 = arith.constant 8 : i32
    %56 = vector.broadcast %c8_i32_10 : i32 to vector<2x1x32xi32>
    %57 = arith.cmpi sge, %55, %56 : vector<2x1x32xi32>
    %58 = arith.select %57, %50, %48 : vector<2x1x32xi1>, vector<2x1x32xi32>
    %c33554432_i32 = arith.constant 33554432 : i32
    %59 = vector.broadcast %c33554432_i32 : i32 to vector<2x1x32xi32>
    %60 = arith.ori %58, %59 : vector<2x1x32xi32>
    %61 = vector.broadcast %60 : vector<2x1x32xi32> to vector<2x17x32xi32>
    %62 = arith.cmpi sge, %7, %61 : vector<2x17x32xi32>
    %63 = arith.extui %62 : vector<2x17x32xi1> to vector<2x17x32xi32>
    %cst_11 = arith.constant dense<0> : vector<2x32xi32>
    %64 = vector.multi_reduction <add>, %63, %cst_11 [1] : vector<2x17x32xi32> to vector<2x32xi32>
    %65 = vector.shape_cast %64 : vector<2x32xi32> to vector<2x1x32xi32>
    %c8_i32_12 = arith.constant 8 : i32
    %66 = vector.broadcast %c8_i32_12 : i32 to vector<2x1x32xi32>
    %67 = arith.cmpi sge, %65, %66 : vector<2x1x32xi32>
    %68 = arith.select %67, %60, %58 : vector<2x1x32xi1>, vector<2x1x32xi32>
    %c16777216_i32 = arith.constant 16777216 : i32
    %69 = vector.broadcast %c16777216_i32 : i32 to vector<2x1x32xi32>
    %70 = arith.ori %68, %69 : vector<2x1x32xi32>
    %71 = vector.broadcast %70 : vector<2x1x32xi32> to vector<2x17x32xi32>
    %72 = arith.cmpi sge, %7, %71 : vector<2x17x32xi32>
    %73 = arith.extui %72 : vector<2x17x32xi1> to vector<2x17x32xi32>
    %cst_13 = arith.constant dense<0> : vector<2x32xi32>
    %74 = vector.multi_reduction <add>, %73, %cst_13 [1] : vector<2x17x32xi32> to vector<2x32xi32>
    %75 = vector.shape_cast %74 : vector<2x32xi32> to vector<2x1x32xi32>
    %c8_i32_14 = arith.constant 8 : i32
    %76 = vector.broadcast %c8_i32_14 : i32 to vector<2x1x32xi32>
    %77 = arith.cmpi sge, %75, %76 : vector<2x1x32xi32>
    %78 = arith.select %77, %70, %68 : vector<2x1x32xi1>, vector<2x1x32xi32>
    %c8388608_i32 = arith.constant 8388608 : i32
    %79 = vector.broadcast %c8388608_i32 : i32 to vector<2x1x32xi32>
    %80 = arith.ori %78, %79 : vector<2x1x32xi32>
    %81 = vector.broadcast %80 : vector<2x1x32xi32> to vector<2x17x32xi32>
    %82 = arith.cmpi sge, %7, %81 : vector<2x17x32xi32>
    %83 = arith.extui %82 : vector<2x17x32xi1> to vector<2x17x32xi32>
    %cst_15 = arith.constant dense<0> : vector<2x32xi32>
    %84 = vector.multi_reduction <add>, %83, %cst_15 [1] : vector<2x17x32xi32> to vector<2x32xi32>
    %85 = vector.shape_cast %84 : vector<2x32xi32> to vector<2x1x32xi32>
    %c8_i32_16 = arith.constant 8 : i32
    %86 = vector.broadcast %c8_i32_16 : i32 to vector<2x1x32xi32>
    %87 = arith.cmpi sge, %85, %86 : vector<2x1x32xi32>
    %88 = arith.select %87, %80, %78 : vector<2x1x32xi1>, vector<2x1x32xi32>
    %c4194304_i32 = arith.constant 4194304 : i32
    %89 = vector.broadcast %c4194304_i32 : i32 to vector<2x1x32xi32>
    %90 = arith.ori %88, %89 : vector<2x1x32xi32>
    %91 = vector.broadcast %90 : vector<2x1x32xi32> to vector<2x17x32xi32>
    %92 = arith.cmpi sge, %7, %91 : vector<2x17x32xi32>
    %93 = arith.extui %92 : vector<2x17x32xi1> to vector<2x17x32xi32>
    %cst_17 = arith.constant dense<0> : vector<2x32xi32>
    %94 = vector.multi_reduction <add>, %93, %cst_17 [1] : vector<2x17x32xi32> to vector<2x32xi32>
    %95 = vector.shape_cast %94 : vector<2x32xi32> to vector<2x1x32xi32>
    %c8_i32_18 = arith.constant 8 : i32
    %96 = vector.broadcast %c8_i32_18 : i32 to vector<2x1x32xi32>
    %97 = arith.cmpi sge, %95, %96 : vector<2x1x32xi32>
    %98 = arith.select %97, %90, %88 : vector<2x1x32xi1>, vector<2x1x32xi32>
    %c2097152_i32 = arith.constant 2097152 : i32
    %99 = vector.broadcast %c2097152_i32 : i32 to vector<2x1x32xi32>
    %100 = arith.ori %98, %99 : vector<2x1x32xi32>
    %101 = vector.broadcast %100 : vector<2x1x32xi32> to vector<2x17x32xi32>
    %102 = arith.cmpi sge, %7, %101 : vector<2x17x32xi32>
    %103 = arith.extui %102 : vector<2x17x32xi1> to vector<2x17x32xi32>
    %cst_19 = arith.constant dense<0> : vector<2x32xi32>
    %104 = vector.multi_reduction <add>, %103, %cst_19 [1] : vector<2x17x32xi32> to vector<2x32xi32>
    %105 = vector.shape_cast %104 : vector<2x32xi32> to vector<2x1x32xi32>
    %c8_i32_20 = arith.constant 8 : i32
    %106 = vector.broadcast %c8_i32_20 : i32 to vector<2x1x32xi32>
    %107 = arith.cmpi sge, %105, %106 : vector<2x1x32xi32>
    %108 = arith.select %107, %100, %98 : vector<2x1x32xi1>, vector<2x1x32xi32>
    %c1048576_i32 = arith.constant 1048576 : i32
    %109 = vector.broadcast %c1048576_i32 : i32 to vector<2x1x32xi32>
    %110 = arith.ori %108, %109 : vector<2x1x32xi32>
    %111 = vector.broadcast %110 : vector<2x1x32xi32> to vector<2x17x32xi32>
    %112 = arith.cmpi sge, %7, %111 : vector<2x17x32xi32>
    %113 = arith.extui %112 : vector<2x17x32xi1> to vector<2x17x32xi32>
    %cst_21 = arith.constant dense<0> : vector<2x32xi32>
    %114 = vector.multi_reduction <add>, %113, %cst_21 [1] : vector<2x17x32xi32> to vector<2x32xi32>
    %115 = vector.shape_cast %114 : vector<2x32xi32> to vector<2x1x32xi32>
    %c8_i32_22 = arith.constant 8 : i32
    %116 = vector.broadcast %c8_i32_22 : i32 to vector<2x1x32xi32>
    %117 = arith.cmpi sge, %115, %116 : vector<2x1x32xi32>
    %118 = arith.select %117, %110, %108 : vector<2x1x32xi1>, vector<2x1x32xi32>
    %c524288_i32 = arith.constant 524288 : i32
    %119 = vector.broadcast %c524288_i32 : i32 to vector<2x1x32xi32>
    %120 = arith.ori %118, %119 : vector<2x1x32xi32>
    %121 = vector.broadcast %120 : vector<2x1x32xi32> to vector<2x17x32xi32>
    %122 = arith.cmpi sge, %7, %121 : vector<2x17x32xi32>
    %123 = arith.extui %122 : vector<2x17x32xi1> to vector<2x17x32xi32>
    %cst_23 = arith.constant dense<0> : vector<2x32xi32>
    %124 = vector.multi_reduction <add>, %123, %cst_23 [1] : vector<2x17x32xi32> to vector<2x32xi32>
    %125 = vector.shape_cast %124 : vector<2x32xi32> to vector<2x1x32xi32>
    %c8_i32_24 = arith.constant 8 : i32
    %126 = vector.broadcast %c8_i32_24 : i32 to vector<2x1x32xi32>
    %127 = arith.cmpi sge, %125, %126 : vector<2x1x32xi32>
    %128 = arith.select %127, %120, %118 : vector<2x1x32xi1>, vector<2x1x32xi32>
    %c262144_i32 = arith.constant 262144 : i32
    %129 = vector.broadcast %c262144_i32 : i32 to vector<2x1x32xi32>
    %130 = arith.ori %128, %129 : vector<2x1x32xi32>
    %131 = vector.broadcast %130 : vector<2x1x32xi32> to vector<2x17x32xi32>
    %132 = arith.cmpi sge, %7, %131 : vector<2x17x32xi32>
    %133 = arith.extui %132 : vector<2x17x32xi1> to vector<2x17x32xi32>
    %cst_25 = arith.constant dense<0> : vector<2x32xi32>
    %134 = vector.multi_reduction <add>, %133, %cst_25 [1] : vector<2x17x32xi32> to vector<2x32xi32>
    %135 = vector.shape_cast %134 : vector<2x32xi32> to vector<2x1x32xi32>
    %c8_i32_26 = arith.constant 8 : i32
    %136 = vector.broadcast %c8_i32_26 : i32 to vector<2x1x32xi32>
    %137 = arith.cmpi sge, %135, %136 : vector<2x1x32xi32>
    %138 = arith.select %137, %130, %128 : vector<2x1x32xi1>, vector<2x1x32xi32>
    %c131072_i32 = arith.constant 131072 : i32
    %139 = vector.broadcast %c131072_i32 : i32 to vector<2x1x32xi32>
    %140 = arith.ori %138, %139 : vector<2x1x32xi32>
    %141 = vector.broadcast %140 : vector<2x1x32xi32> to vector<2x17x32xi32>
    %142 = arith.cmpi sge, %7, %141 : vector<2x17x32xi32>
    %143 = arith.extui %142 : vector<2x17x32xi1> to vector<2x17x32xi32>
    %cst_27 = arith.constant dense<0> : vector<2x32xi32>
    %144 = vector.multi_reduction <add>, %143, %cst_27 [1] : vector<2x17x32xi32> to vector<2x32xi32>
    %145 = vector.shape_cast %144 : vector<2x32xi32> to vector<2x1x32xi32>
    %c8_i32_28 = arith.constant 8 : i32
    %146 = vector.broadcast %c8_i32_28 : i32 to vector<2x1x32xi32>
    %147 = arith.cmpi sge, %145, %146 : vector<2x1x32xi32>
    %148 = arith.select %147, %140, %138 : vector<2x1x32xi1>, vector<2x1x32xi32>
    %c65536_i32 = arith.constant 65536 : i32
    %149 = vector.broadcast %c65536_i32 : i32 to vector<2x1x32xi32>
    %150 = arith.ori %148, %149 : vector<2x1x32xi32>
    %151 = vector.broadcast %150 : vector<2x1x32xi32> to vector<2x17x32xi32>
    %152 = arith.cmpi sge, %7, %151 : vector<2x17x32xi32>
    %153 = arith.extui %152 : vector<2x17x32xi1> to vector<2x17x32xi32>
    %cst_29 = arith.constant dense<0> : vector<2x32xi32>
    %154 = vector.multi_reduction <add>, %153, %cst_29 [1] : vector<2x17x32xi32> to vector<2x32xi32>
    %155 = vector.shape_cast %154 : vector<2x32xi32> to vector<2x1x32xi32>
    %c8_i32_30 = arith.constant 8 : i32
    %156 = vector.broadcast %c8_i32_30 : i32 to vector<2x1x32xi32>
    %157 = arith.cmpi sge, %155, %156 : vector<2x1x32xi32>
    %158 = arith.select %157, %150, %148 : vector<2x1x32xi1>, vector<2x1x32xi32>
    %c32768_i32 = arith.constant 32768 : i32
    %159 = vector.broadcast %c32768_i32 : i32 to vector<2x1x32xi32>
    %160 = arith.ori %158, %159 : vector<2x1x32xi32>
    %161 = vector.broadcast %160 : vector<2x1x32xi32> to vector<2x17x32xi32>
    %162 = arith.cmpi sge, %7, %161 : vector<2x17x32xi32>
    %163 = arith.extui %162 : vector<2x17x32xi1> to vector<2x17x32xi32>
    %cst_31 = arith.constant dense<0> : vector<2x32xi32>
    %164 = vector.multi_reduction <add>, %163, %cst_31 [1] : vector<2x17x32xi32> to vector<2x32xi32>
    %165 = vector.shape_cast %164 : vector<2x32xi32> to vector<2x1x32xi32>
    %c8_i32_32 = arith.constant 8 : i32
    %166 = vector.broadcast %c8_i32_32 : i32 to vector<2x1x32xi32>
    %167 = arith.cmpi sge, %165, %166 : vector<2x1x32xi32>
    %168 = arith.select %167, %160, %158 : vector<2x1x32xi1>, vector<2x1x32xi32>
    %c16384_i32 = arith.constant 16384 : i32
    %169 = vector.broadcast %c16384_i32 : i32 to vector<2x1x32xi32>
    %170 = arith.ori %168, %169 : vector<2x1x32xi32>
    %171 = vector.broadcast %170 : vector<2x1x32xi32> to vector<2x17x32xi32>
    %172 = arith.cmpi sge, %7, %171 : vector<2x17x32xi32>
    %173 = arith.extui %172 : vector<2x17x32xi1> to vector<2x17x32xi32>
    %cst_33 = arith.constant dense<0> : vector<2x32xi32>
    %174 = vector.multi_reduction <add>, %173, %cst_33 [1] : vector<2x17x32xi32> to vector<2x32xi32>
    %175 = vector.shape_cast %174 : vector<2x32xi32> to vector<2x1x32xi32>
    %c8_i32_34 = arith.constant 8 : i32
    %176 = vector.broadcast %c8_i32_34 : i32 to vector<2x1x32xi32>
    %177 = arith.cmpi sge, %175, %176 : vector<2x1x32xi32>
    %178 = arith.select %177, %170, %168 : vector<2x1x32xi1>, vector<2x1x32xi32>
    %c8192_i32 = arith.constant 8192 : i32
    %179 = vector.broadcast %c8192_i32 : i32 to vector<2x1x32xi32>
    %180 = arith.ori %178, %179 : vector<2x1x32xi32>
    %181 = vector.broadcast %180 : vector<2x1x32xi32> to vector<2x17x32xi32>
    %182 = arith.cmpi sge, %7, %181 : vector<2x17x32xi32>
    %183 = arith.extui %182 : vector<2x17x32xi1> to vector<2x17x32xi32>
    %cst_35 = arith.constant dense<0> : vector<2x32xi32>
    %184 = vector.multi_reduction <add>, %183, %cst_35 [1] : vector<2x17x32xi32> to vector<2x32xi32>
    %185 = vector.shape_cast %184 : vector<2x32xi32> to vector<2x1x32xi32>
    %c8_i32_36 = arith.constant 8 : i32
    %186 = vector.broadcast %c8_i32_36 : i32 to vector<2x1x32xi32>
    %187 = arith.cmpi sge, %185, %186 : vector<2x1x32xi32>
    %188 = arith.select %187, %180, %178 : vector<2x1x32xi1>, vector<2x1x32xi32>
    %c4096_i32 = arith.constant 4096 : i32
    %189 = vector.broadcast %c4096_i32 : i32 to vector<2x1x32xi32>
    %190 = arith.ori %188, %189 : vector<2x1x32xi32>
    %191 = vector.broadcast %190 : vector<2x1x32xi32> to vector<2x17x32xi32>
    %192 = arith.cmpi sge, %7, %191 : vector<2x17x32xi32>
    %193 = arith.extui %192 : vector<2x17x32xi1> to vector<2x17x32xi32>
    %cst_37 = arith.constant dense<0> : vector<2x32xi32>
    %194 = vector.multi_reduction <add>, %193, %cst_37 [1] : vector<2x17x32xi32> to vector<2x32xi32>
    %195 = vector.shape_cast %194 : vector<2x32xi32> to vector<2x1x32xi32>
    %c8_i32_38 = arith.constant 8 : i32
    %196 = vector.broadcast %c8_i32_38 : i32 to vector<2x1x32xi32>
    %197 = arith.cmpi sge, %195, %196 : vector<2x1x32xi32>
    %198 = arith.select %197, %190, %188 : vector<2x1x32xi1>, vector<2x1x32xi32>
    %c2048_i32 = arith.constant 2048 : i32
    %199 = vector.broadcast %c2048_i32 : i32 to vector<2x1x32xi32>
    %200 = arith.ori %198, %199 : vector<2x1x32xi32>
    %201 = vector.broadcast %200 : vector<2x1x32xi32> to vector<2x17x32xi32>
    %202 = arith.cmpi sge, %7, %201 : vector<2x17x32xi32>
    %203 = arith.extui %202 : vector<2x17x32xi1> to vector<2x17x32xi32>
    %cst_39 = arith.constant dense<0> : vector<2x32xi32>
    %204 = vector.multi_reduction <add>, %203, %cst_39 [1] : vector<2x17x32xi32> to vector<2x32xi32>
    %205 = vector.shape_cast %204 : vector<2x32xi32> to vector<2x1x32xi32>
    %c8_i32_40 = arith.constant 8 : i32
    %206 = vector.broadcast %c8_i32_40 : i32 to vector<2x1x32xi32>
    %207 = arith.cmpi sge, %205, %206 : vector<2x1x32xi32>
    %208 = arith.select %207, %200, %198 : vector<2x1x32xi1>, vector<2x1x32xi32>
    %c1024_i32 = arith.constant 1024 : i32
    %209 = vector.broadcast %c1024_i32 : i32 to vector<2x1x32xi32>
    %210 = arith.ori %208, %209 : vector<2x1x32xi32>
    %211 = vector.broadcast %210 : vector<2x1x32xi32> to vector<2x17x32xi32>
    %212 = arith.cmpi sge, %7, %211 : vector<2x17x32xi32>
    %213 = arith.extui %212 : vector<2x17x32xi1> to vector<2x17x32xi32>
    %cst_41 = arith.constant dense<0> : vector<2x32xi32>
    %214 = vector.multi_reduction <add>, %213, %cst_41 [1] : vector<2x17x32xi32> to vector<2x32xi32>
    %215 = vector.shape_cast %214 : vector<2x32xi32> to vector<2x1x32xi32>
    %c8_i32_42 = arith.constant 8 : i32
    %216 = vector.broadcast %c8_i32_42 : i32 to vector<2x1x32xi32>
    %217 = arith.cmpi sge, %215, %216 : vector<2x1x32xi32>
    %218 = arith.select %217, %210, %208 : vector<2x1x32xi1>, vector<2x1x32xi32>
    %c512_i32 = arith.constant 512 : i32
    %219 = vector.broadcast %c512_i32 : i32 to vector<2x1x32xi32>
    %220 = arith.ori %218, %219 : vector<2x1x32xi32>
    %221 = vector.broadcast %220 : vector<2x1x32xi32> to vector<2x17x32xi32>
    %222 = arith.cmpi sge, %7, %221 : vector<2x17x32xi32>
    %223 = arith.extui %222 : vector<2x17x32xi1> to vector<2x17x32xi32>
    %cst_43 = arith.constant dense<0> : vector<2x32xi32>
    %224 = vector.multi_reduction <add>, %223, %cst_43 [1] : vector<2x17x32xi32> to vector<2x32xi32>
    %225 = vector.shape_cast %224 : vector<2x32xi32> to vector<2x1x32xi32>
    %c8_i32_44 = arith.constant 8 : i32
    %226 = vector.broadcast %c8_i32_44 : i32 to vector<2x1x32xi32>
    %227 = arith.cmpi sge, %225, %226 : vector<2x1x32xi32>
    %228 = arith.select %227, %220, %218 : vector<2x1x32xi1>, vector<2x1x32xi32>
    %c256_i32 = arith.constant 256 : i32
    %229 = vector.broadcast %c256_i32 : i32 to vector<2x1x32xi32>
    %230 = arith.ori %228, %229 : vector<2x1x32xi32>
    %231 = vector.broadcast %230 : vector<2x1x32xi32> to vector<2x17x32xi32>
    %232 = arith.cmpi sge, %7, %231 : vector<2x17x32xi32>
    %233 = arith.extui %232 : vector<2x17x32xi1> to vector<2x17x32xi32>
    %cst_45 = arith.constant dense<0> : vector<2x32xi32>
    %234 = vector.multi_reduction <add>, %233, %cst_45 [1] : vector<2x17x32xi32> to vector<2x32xi32>
    %235 = vector.shape_cast %234 : vector<2x32xi32> to vector<2x1x32xi32>
    %c8_i32_46 = arith.constant 8 : i32
    %236 = vector.broadcast %c8_i32_46 : i32 to vector<2x1x32xi32>
    %237 = arith.cmpi sge, %235, %236 : vector<2x1x32xi32>
    %238 = arith.select %237, %230, %228 : vector<2x1x32xi1>, vector<2x1x32xi32>
    %c128_i32 = arith.constant 128 : i32
    %239 = vector.broadcast %c128_i32 : i32 to vector<2x1x32xi32>
    %240 = arith.ori %238, %239 : vector<2x1x32xi32>
    %241 = vector.broadcast %240 : vector<2x1x32xi32> to vector<2x17x32xi32>
    %242 = arith.cmpi sge, %7, %241 : vector<2x17x32xi32>
    %243 = arith.extui %242 : vector<2x17x32xi1> to vector<2x17x32xi32>
    %cst_47 = arith.constant dense<0> : vector<2x32xi32>
    %244 = vector.multi_reduction <add>, %243, %cst_47 [1] : vector<2x17x32xi32> to vector<2x32xi32>
    %245 = vector.shape_cast %244 : vector<2x32xi32> to vector<2x1x32xi32>
    %c8_i32_48 = arith.constant 8 : i32
    %246 = vector.broadcast %c8_i32_48 : i32 to vector<2x1x32xi32>
    %247 = arith.cmpi sge, %245, %246 : vector<2x1x32xi32>
    %248 = arith.select %247, %240, %238 : vector<2x1x32xi1>, vector<2x1x32xi32>
    %c64_i32 = arith.constant 64 : i32
    %249 = vector.broadcast %c64_i32 : i32 to vector<2x1x32xi32>
    %250 = arith.ori %248, %249 : vector<2x1x32xi32>
    %251 = vector.broadcast %250 : vector<2x1x32xi32> to vector<2x17x32xi32>
    %252 = arith.cmpi sge, %7, %251 : vector<2x17x32xi32>
    %253 = arith.extui %252 : vector<2x17x32xi1> to vector<2x17x32xi32>
    %cst_49 = arith.constant dense<0> : vector<2x32xi32>
    %254 = vector.multi_reduction <add>, %253, %cst_49 [1] : vector<2x17x32xi32> to vector<2x32xi32>
    %255 = vector.shape_cast %254 : vector<2x32xi32> to vector<2x1x32xi32>
    %c8_i32_50 = arith.constant 8 : i32
    %256 = vector.broadcast %c8_i32_50 : i32 to vector<2x1x32xi32>
    %257 = arith.cmpi sge, %255, %256 : vector<2x1x32xi32>
    %258 = arith.select %257, %250, %248 : vector<2x1x32xi1>, vector<2x1x32xi32>
    %c32_i32 = arith.constant 32 : i32
    %259 = vector.broadcast %c32_i32 : i32 to vector<2x1x32xi32>
    %260 = arith.ori %258, %259 : vector<2x1x32xi32>
    %261 = vector.broadcast %260 : vector<2x1x32xi32> to vector<2x17x32xi32>
    %262 = arith.cmpi sge, %7, %261 : vector<2x17x32xi32>
    %263 = arith.extui %262 : vector<2x17x32xi1> to vector<2x17x32xi32>
    %cst_51 = arith.constant dense<0> : vector<2x32xi32>
    %264 = vector.multi_reduction <add>, %263, %cst_51 [1] : vector<2x17x32xi32> to vector<2x32xi32>
    %265 = vector.shape_cast %264 : vector<2x32xi32> to vector<2x1x32xi32>
    %c8_i32_52 = arith.constant 8 : i32
    %266 = vector.broadcast %c8_i32_52 : i32 to vector<2x1x32xi32>
    %267 = arith.cmpi sge, %265, %266 : vector<2x1x32xi32>
    %268 = arith.select %267, %260, %258 : vector<2x1x32xi1>, vector<2x1x32xi32>
    %c16_i32 = arith.constant 16 : i32
    %269 = vector.broadcast %c16_i32 : i32 to vector<2x1x32xi32>
    %270 = arith.ori %268, %269 : vector<2x1x32xi32>
    %271 = vector.broadcast %270 : vector<2x1x32xi32> to vector<2x17x32xi32>
    %272 = arith.cmpi sge, %7, %271 : vector<2x17x32xi32>
    %273 = arith.extui %272 : vector<2x17x32xi1> to vector<2x17x32xi32>
    %cst_53 = arith.constant dense<0> : vector<2x32xi32>
    %274 = vector.multi_reduction <add>, %273, %cst_53 [1] : vector<2x17x32xi32> to vector<2x32xi32>
    %275 = vector.shape_cast %274 : vector<2x32xi32> to vector<2x1x32xi32>
    %c8_i32_54 = arith.constant 8 : i32
    %276 = vector.broadcast %c8_i32_54 : i32 to vector<2x1x32xi32>
    %277 = arith.cmpi sge, %275, %276 : vector<2x1x32xi32>
    %278 = arith.select %277, %270, %268 : vector<2x1x32xi1>, vector<2x1x32xi32>
    %c8_i32_55 = arith.constant 8 : i32
    %279 = vector.broadcast %c8_i32_55 : i32 to vector<2x1x32xi32>
    %280 = arith.ori %278, %279 : vector<2x1x32xi32>
    %281 = vector.broadcast %280 : vector<2x1x32xi32> to vector<2x17x32xi32>
    %282 = arith.cmpi sge, %7, %281 : vector<2x17x32xi32>
    %283 = arith.extui %282 : vector<2x17x32xi1> to vector<2x17x32xi32>
    %cst_56 = arith.constant dense<0> : vector<2x32xi32>
    %284 = vector.multi_reduction <add>, %283, %cst_56 [1] : vector<2x17x32xi32> to vector<2x32xi32>
    %285 = vector.shape_cast %284 : vector<2x32xi32> to vector<2x1x32xi32>
    %c8_i32_57 = arith.constant 8 : i32
    %286 = vector.broadcast %c8_i32_57 : i32 to vector<2x1x32xi32>
    %287 = arith.cmpi sge, %285, %286 : vector<2x1x32xi32>
    %288 = arith.select %287, %280, %278 : vector<2x1x32xi1>, vector<2x1x32xi32>
    %c4_i32 = arith.constant 4 : i32
    %289 = vector.broadcast %c4_i32 : i32 to vector<2x1x32xi32>
    %290 = arith.ori %288, %289 : vector<2x1x32xi32>
    %291 = vector.broadcast %290 : vector<2x1x32xi32> to vector<2x17x32xi32>
    %292 = arith.cmpi sge, %7, %291 : vector<2x17x32xi32>
    %293 = arith.extui %292 : vector<2x17x32xi1> to vector<2x17x32xi32>
    %cst_58 = arith.constant dense<0> : vector<2x32xi32>
    %294 = vector.multi_reduction <add>, %293, %cst_58 [1] : vector<2x17x32xi32> to vector<2x32xi32>
    %295 = vector.shape_cast %294 : vector<2x32xi32> to vector<2x1x32xi32>
    %c8_i32_59 = arith.constant 8 : i32
    %296 = vector.broadcast %c8_i32_59 : i32 to vector<2x1x32xi32>
    %297 = arith.cmpi sge, %295, %296 : vector<2x1x32xi32>
    %298 = arith.select %297, %290, %288 : vector<2x1x32xi1>, vector<2x1x32xi32>
    %c2_i32 = arith.constant 2 : i32
    %299 = vector.broadcast %c2_i32 : i32 to vector<2x1x32xi32>
    %300 = arith.ori %298, %299 : vector<2x1x32xi32>
    %301 = vector.broadcast %300 : vector<2x1x32xi32> to vector<2x17x32xi32>
    %302 = arith.cmpi sge, %7, %301 : vector<2x17x32xi32>
    %303 = arith.extui %302 : vector<2x17x32xi1> to vector<2x17x32xi32>
    %cst_60 = arith.constant dense<0> : vector<2x32xi32>
    %304 = vector.multi_reduction <add>, %303, %cst_60 [1] : vector<2x17x32xi32> to vector<2x32xi32>
    %305 = vector.shape_cast %304 : vector<2x32xi32> to vector<2x1x32xi32>
    %c8_i32_61 = arith.constant 8 : i32
    %306 = vector.broadcast %c8_i32_61 : i32 to vector<2x1x32xi32>
    %307 = arith.cmpi sge, %305, %306 : vector<2x1x32xi32>
    %308 = arith.select %307, %300, %298 : vector<2x1x32xi1>, vector<2x1x32xi32>
    %c1_i32 = arith.constant 1 : i32
    %309 = vector.broadcast %c1_i32 : i32 to vector<2x1x32xi32>
    %310 = arith.ori %308, %309 : vector<2x1x32xi32>
    %311 = vector.broadcast %310 : vector<2x1x32xi32> to vector<2x17x32xi32>
    %312 = arith.cmpi sge, %7, %311 : vector<2x17x32xi32>
    %313 = arith.extui %312 : vector<2x17x32xi1> to vector<2x17x32xi32>
    %cst_62 = arith.constant dense<0> : vector<2x32xi32>
    %314 = vector.multi_reduction <add>, %313, %cst_62 [1] : vector<2x17x32xi32> to vector<2x32xi32>
    %315 = vector.shape_cast %314 : vector<2x32xi32> to vector<2x1x32xi32>
    %c8_i32_63 = arith.constant 8 : i32
    %316 = vector.broadcast %c8_i32_63 : i32 to vector<2x1x32xi32>
    %317 = arith.cmpi sge, %315, %316 : vector<2x1x32xi32>
    %318 = arith.select %317, %310, %308 : vector<2x1x32xi1>, vector<2x1x32xi32>
    %319 = vector.broadcast %318 : vector<2x1x32xi32> to vector<2x17x32xi32>
    %320 = arith.cmpi sgt, %7, %319 : vector<2x17x32xi32>
    %321 = vector.broadcast %318 : vector<2x1x32xi32> to vector<2x17x32xi32>
    %322 = arith.cmpi eq, %7, %321 : vector<2x17x32xi32>
    %323 = arith.extui %320 : vector<2x17x32xi1> to vector<2x17x32xi32>
    %cst_64 = arith.constant dense<0> : vector<2x32xi32>
    %324 = vector.multi_reduction <add>, %323, %cst_64 [1] : vector<2x17x32xi32> to vector<2x32xi32>
    %325 = vector.shape_cast %324 : vector<2x32xi32> to vector<2x1x32xi32>
    %c8_i32_65 = arith.constant 8 : i32
    %326 = vector.broadcast %c8_i32_65 : i32 to vector<2x1x32xi32>
    %327 = arith.subi %326, %325 : vector<2x1x32xi32>
    %c31_i32 = arith.constant 31 : i32
    %328 = vector.broadcast %c31_i32 : i32 to vector<2x17x32xi32>
    %329 = arith.subi %328, %3 : vector<2x17x32xi32>
    %c-1_i32_66 = arith.constant -1 : i32
    %330 = vector.broadcast %c-1_i32_66 : i32 to vector<2x17x32xi32>
    %331 = arith.select %322, %329, %330 : vector<2x17x32xi1>, vector<2x17x32xi32>
    %c0_i32_67 = arith.constant 0 : i32
    %332 = vector.broadcast %c0_i32_67 : i32 to vector<2x1x32xi32>
    %c16_i32_68 = arith.constant 16 : i32
    %333 = vector.broadcast %c16_i32_68 : i32 to vector<2x1x32xi32>
    %334 = arith.ori %332, %333 : vector<2x1x32xi32>
    %335 = vector.broadcast %334 : vector<2x1x32xi32> to vector<2x17x32xi32>
    %336 = arith.cmpi sge, %331, %335 : vector<2x17x32xi32>
    %337 = arith.extui %336 : vector<2x17x32xi1> to vector<2x17x32xi32>
    %cst_69 = arith.constant dense<0> : vector<2x32xi32>
    %338 = vector.multi_reduction <add>, %337, %cst_69 [1] : vector<2x17x32xi32> to vector<2x32xi32>
    %339 = vector.shape_cast %338 : vector<2x32xi32> to vector<2x1x32xi32>
    %340 = arith.cmpi sge, %339, %327 : vector<2x1x32xi32>
    %341 = arith.select %340, %334, %332 : vector<2x1x32xi1>, vector<2x1x32xi32>
    %c8_i32_70 = arith.constant 8 : i32
    %342 = vector.broadcast %c8_i32_70 : i32 to vector<2x1x32xi32>
    %343 = arith.ori %341, %342 : vector<2x1x32xi32>
    %344 = vector.broadcast %343 : vector<2x1x32xi32> to vector<2x17x32xi32>
    %345 = arith.cmpi sge, %331, %344 : vector<2x17x32xi32>
    %346 = arith.extui %345 : vector<2x17x32xi1> to vector<2x17x32xi32>
    %cst_71 = arith.constant dense<0> : vector<2x32xi32>
    %347 = vector.multi_reduction <add>, %346, %cst_71 [1] : vector<2x17x32xi32> to vector<2x32xi32>
    %348 = vector.shape_cast %347 : vector<2x32xi32> to vector<2x1x32xi32>
    %349 = arith.cmpi sge, %348, %327 : vector<2x1x32xi32>
    %350 = arith.select %349, %343, %341 : vector<2x1x32xi1>, vector<2x1x32xi32>
    %c4_i32_72 = arith.constant 4 : i32
    %351 = vector.broadcast %c4_i32_72 : i32 to vector<2x1x32xi32>
    %352 = arith.ori %350, %351 : vector<2x1x32xi32>
    %353 = vector.broadcast %352 : vector<2x1x32xi32> to vector<2x17x32xi32>
    %354 = arith.cmpi sge, %331, %353 : vector<2x17x32xi32>
    %355 = arith.extui %354 : vector<2x17x32xi1> to vector<2x17x32xi32>
    %cst_73 = arith.constant dense<0> : vector<2x32xi32>
    %356 = vector.multi_reduction <add>, %355, %cst_73 [1] : vector<2x17x32xi32> to vector<2x32xi32>
    %357 = vector.shape_cast %356 : vector<2x32xi32> to vector<2x1x32xi32>
    %358 = arith.cmpi sge, %357, %327 : vector<2x1x32xi32>
    %359 = arith.select %358, %352, %350 : vector<2x1x32xi1>, vector<2x1x32xi32>
    %c2_i32_74 = arith.constant 2 : i32
    %360 = vector.broadcast %c2_i32_74 : i32 to vector<2x1x32xi32>
    %361 = arith.ori %359, %360 : vector<2x1x32xi32>
    %362 = vector.broadcast %361 : vector<2x1x32xi32> to vector<2x17x32xi32>
    %363 = arith.cmpi sge, %331, %362 : vector<2x17x32xi32>
    %364 = arith.extui %363 : vector<2x17x32xi1> to vector<2x17x32xi32>
    %cst_75 = arith.constant dense<0> : vector<2x32xi32>
    %365 = vector.multi_reduction <add>, %364, %cst_75 [1] : vector<2x17x32xi32> to vector<2x32xi32>
    %366 = vector.shape_cast %365 : vector<2x32xi32> to vector<2x1x32xi32>
    %367 = arith.cmpi sge, %366, %327 : vector<2x1x32xi32>
    %368 = arith.select %367, %361, %359 : vector<2x1x32xi1>, vector<2x1x32xi32>
    %c1_i32_76 = arith.constant 1 : i32
    %369 = vector.broadcast %c1_i32_76 : i32 to vector<2x1x32xi32>
    %370 = arith.ori %368, %369 : vector<2x1x32xi32>
    %371 = vector.broadcast %370 : vector<2x1x32xi32> to vector<2x17x32xi32>
    %372 = arith.cmpi sge, %331, %371 : vector<2x17x32xi32>
    %373 = arith.extui %372 : vector<2x17x32xi1> to vector<2x17x32xi32>
    %cst_77 = arith.constant dense<0> : vector<2x32xi32>
    %374 = vector.multi_reduction <add>, %373, %cst_77 [1] : vector<2x17x32xi32> to vector<2x32xi32>
    %375 = vector.shape_cast %374 : vector<2x32xi32> to vector<2x1x32xi32>
    %376 = arith.cmpi sge, %375, %327 : vector<2x1x32xi32>
    %377 = arith.select %376, %370, %368 : vector<2x1x32xi1>, vector<2x1x32xi32>
    %378 = arith.ori %5, %320 : vector<2x17x32xi1>
    %379 = vector.broadcast %377 : vector<2x1x32xi32> to vector<2x17x32xi32>
    %380 = arith.cmpi sge, %331, %379 : vector<2x17x32xi32>
    %381 = arith.andi %322, %380 : vector<2x17x32xi1>
    %382 = arith.ori %378, %381 : vector<2x17x32xi1>
    %cst_78 = arith.constant 0.000000e+00 : f32
    %383 = vector.broadcast %cst_78 : f32 to vector<2x17x32xf32>
    %384 = arith.select %382, %0, %383 : vector<2x17x32xi1>, vector<2x17x32xf32>
    %c0_79 = arith.constant 0 : index
    %c0_80 = arith.constant 0 : index
    %c0_81 = arith.constant 0 : index
    %385 = vector.load %arg2[%c0_79, %c0_80, %c0_81] : memref<2x17x32xf32, #tpu.memory_space<vmem>>, vector<2x17x32xf32>
    tpu.vector_store %arg2[%c0_79, %c0_80, %c0_81], %384 {strides = array<i32>} : memref<2x17x32xf32, #tpu.memory_space<vmem>>, vector<2x17x32xf32>,
    return
  }
  func.func @transform_0(%arg0: i32) -> (i32, i32, i32) {
    %c0_i32 = arith.constant 0 : i32
    %c0_i32_0 = arith.constant 0 : i32
    %c0_i32_1 = arith.constant 0 : i32
    return %arg0, %c0_i32, %c0_i32_0 : i32, i32, i32
  }
  func.func @transform_1(%arg0: i32) -> (i32, i32, i32) {
    %c0_i32 = arith.constant 0 : i32
    %c0_i32_0 = arith.constant 0 : i32
    %c0_i32_1 = arith.constant 0 : i32
    return %arg0, %c0_i32, %c0_i32_0 : i32, i32, i32
  }
}

</mosaic_0001>

<llo_original>
// kernel: tpu_custom_call.1
$region0: #{tpu_custom_call.1}
  #allocation0 [shape = 'u32[]', space=smem, size = 0x4, offset = 0x4, fixed_abs, tag = 'smem constant byte address 0x4 - core index']
  #allocation1 [shape = 'u32[144,128]{1,0:T(1,128)}', space=vmem, size = 0x12000, scoped, tag = 'internal scratch']
  %s0 = inlined_call_operand.vmem [shape: f32[2,17,32], index: 0, kind: input, shape index: {}]
  %s1 = inlined_call_operand.vmem [shape: f32[2,17,32], index: 1, kind: output, shape index: {}]
  %s2 = sld [smem:[#allocation0]]
  $region14: #{tpu_custom_call.1} parent=0
    _
  %s4 = ssub.s32 1, %s2
  %s5 = scalar_select 0, %s4, %s2
  // Predicated region
  $region2: #{tpu_custom_call.1} parent=0 // pred_check
    _
  $region3: #{tpu_custom_call.1} parent=0 // pred_check_branch
    %7 = sbr.rel (0) target = $region5
  $region4: #{tpu_custom_call.1} parent=0 // pred_region
    _
  $region5: #{tpu_custom_call.1} parent=0 // pred_fallthru
    _
  %v8 = vld [vmem:[%s0] sm:$0xff]
  %v9 = vld [vmem:[%s0 + $0x8] sm:$0xff]
  %v10 = vld [vmem:[%s0 + $0x10] sm:$0x1]
  %v11 = vld [vmem:[%s0 + $0x18] sm:$0xff]
  %v12 = vld [vmem:[%s0 + $0x20] sm:$0xff]
  %v13 = vld [vmem:[%s0 + $0x28] sm:$0x1]
  %v14 = vand.u32 2147483647, %v8
  %v15 = vand.u32 2147483647, %v9
  %v16 = vand.u32 2147483647, %v10
  %v17 = vand.u32 2147483647, %v11
  %v18 = vand.u32 2147483647, %v12
  %v19 = vand.u32 2147483647, %v13
  %v26 = vlaneseq
  %v27 = vshrl.u32 %v26, 7
  %v28 = vadd.s32 %v27, 8
  %v29 = vadd.s32 %v27, 16
  %vm30 = vcmp.eq.s32.totalorder %v27, 0
  %vm31 = vcmp.eq.s32.totalorder %v28, 0
  %vm32 = vcmp.eq.s32.totalorder %v29, 0
  %v33 = vsel %vm30, 4294967295, %v14
  %v34 = vsel %vm31, 4294967295, %v15
  %v35 = vsel %vm32, 4294967295, %v16
  %v36 = vsel %vm30, 4294967295, %v17
  %v37 = vsel %vm31, 4294967295, %v18
  %v38 = vsel %vm32, 4294967295, %v19
  %vm39 = vcmp.ge.s32.totalorder %v33, 1073741824
  %vm40 = vcmp.ge.s32.totalorder %v34, 1073741824
  %vm41 = vcmp.ge.s32.totalorder %v35, 1073741824
  %vm42 = vcmp.ge.s32.totalorder %v36, 1073741824
  %vm43 = vcmp.ge.s32.totalorder %v37, 1073741824
  %vm44 = vcmp.ge.s32.totalorder %v38, 1073741824
  %v45 = vsel %vm39, 1, 0
  %v46 = vsel %vm40, 1, 0
  %v47 = vsel %vm41, 1, 0
  %v48 = vsel %vm42, 1, 0
  %v49 = vsel %vm43, 1, 0
  %v50 = vsel %vm44, 1, 0
  %vm51 = vcmask 261120
  %v52 = vsel %vm51, %v45, 0
  %v53 = vsel %vm51, %v46, 0
  %vm54 = vcmask 253952
  %v55 = vsel %vm54, %v47, 0
  %v56 = vadd.s32 %v52, %v55
  %v57 = vadd.s32 %v56, %v53
  %v58 = vrot.slane %v57, 4
  %v59 = vadd.s32 %v57, %v58
  %v60 = vrot.slane %v59, 2
  %v61 = vadd.s32 %v59, %v60
  %v62 = vrot.slane %v61, 1
  %v63 = vadd.s32 %v61, %v62
  %v64 = vsel %vm51, %v48, 0
  %v65 = vsel %vm51, %v49, 0
  %v66 = vsel %vm54, %v50, 0
  %v67 = vadd.s32 %v64, %v66
  %v68 = vadd.s32 %v67, %v65
  %v69 = vrot.slane %v68, 4
  %v70 = vadd.s32 %v68, %v69
  %v71 = vrot.slane %v70, 2
  %v72 = vadd.s32 %v70, %v71
  %v73 = vrot.slane %v72, 1
  %v74 = vadd.s32 %v72, %v73
  %vm75 = vcmp.ge.s32.totalorder %v63, 8
  %vm76 = vcmp.ge.s32.totalorder %v74, 8
  %v77 = vsel %vm75, 1073741824, 0
  %v78 = vsel %vm76, 1073741824, 0
  %v79 = vor.u32 %v77, 536870912
  %v80 = vor.u32 %v78, 536870912
  %vm81 = vcmp.ge.s32.totalorder %v33, %v79
  %vm82 = vcmp.ge.s32.totalorder %v34, %v79
  %vm83 = vcmp.ge.s32.totalorder %v35, %v79
  %vm84 = vcmp.ge.s32.totalorder %v36, %v80
  %vm85 = vcmp.ge.s32.totalorder %v37, %v80
  %vm86 = vcmp.ge.s32.totalorder %v38, %v80
  %v87 = vsel %vm81, 1, 0
  %v88 = vsel %vm82, 1, 0
  %v89 = vsel %vm83, 1, 0
  %v90 = vsel %vm84, 1, 0
  %v91 = vsel %vm85, 1, 0
  %v92 = vsel %vm86, 1, 0
  %v93 = vsel %vm51, %v87, 0
  %v94 = vsel %vm51, %v88, 0
  %v95 = vsel %vm54, %v89, 0
  %v96 = vadd.s32 %v93, %v95
  %v97 = vadd.s32 %v96, %v94
  %v98 = vrot.slane %v97, 4
  %v99 = vadd.s32 %v97, %v98
  %v100 = vrot.slane %v99, 2
  %v101 = vadd.s32 %v99, %v100
  %v102 = vrot.slane %v101, 1
  %v103 = vadd.s32 %v101, %v102
  %v104 = vsel %vm51, %v90, 0
  %v105 = vsel %vm51, %v91, 0
  %v106 = vsel %vm54, %v92, 0
  %v107 = vadd.s32 %v104, %v106
  %v108 = vadd.s32 %v107, %v105
  %v109 = vrot.slane %v108, 4
  %v110 = vadd.s32 %v108, %v109
  %v111 = vrot.slane %v110, 2
  %v112 = vadd.s32 %v110, %v111
  %v113 = vrot.slane %v112, 1
  %v114 = vadd.s32 %v112, %v113
  %vm115 = vcmp.ge.s32.totalorder %v103, 8
  %vm116 = vcmp.ge.s32.totalorder %v114, 8
  %v117 = vsel %vm115, %v79, %v77
  %v118 = vsel %vm116, %v80, %v78
  %v119 = vor.u32 %v117, 268435456
  %v120 = vor.u32 %v118, 268435456
  %vm121 = vcmp.ge.s32.totalorder %v33, %v119
  %vm122 = vcmp.ge.s32.totalorder %v34, %v119
  %vm123 = vcmp.ge.s32.totalorder %v35, %v119
  %vm124 = vcmp.ge.s32.totalorder %v36, %v120
  %vm125 = vcmp.ge.s32.totalorder %v37, %v120
  %vm126 = vcmp.ge.s32.totalorder %v38, %v120
  %v127 = vsel %vm121, 1, 0
  %v128 = vsel %vm122, 1, 0
  %v129 = vsel %vm123, 1, 0
  %v130 = vsel %vm124, 1, 0
  %v131 = vsel %vm125, 1, 0
  %v132 = vsel %vm126, 1, 0
  %v133 = vsel %vm51, %v127, 0
  %v134 = vsel %vm51, %v128, 0
  %v135 = vsel %vm54, %v129, 0
  %v136 = vadd.s32 %v133, %v135
  %v137 = vadd.s32 %v136, %v134
  %v138 = vrot.slane %v137, 4
  %v139 = vadd.s32 %v137, %v138
  %v140 = vrot.slane %v139, 2
  %v141 = vadd.s32 %v139, %v140
  %v142 = vrot.slane %v141, 1
  %v143 = vadd.s32 %v141, %v142
  %v144 = vsel %vm51, %v130, 0
  %v145 = vsel %vm51, %v131, 0
  %v146 = vsel %vm54, %v132, 0
  %v147 = vadd.s32 %v144, %v146
  %v148 = vadd.s32 %v147, %v145
  %v149 = vrot.slane %v148, 4
  %v150 = vadd.s32 %v148, %v149
  %v151 = vrot.slane %v150, 2
  %v152 = vadd.s32 %v150, %v151
  %v153 = vrot.slane %v152, 1
  %v154 = vadd.s32 %v152, %v153
  %vm155 = vcmp.ge.s32.totalorder %v143, 8
  %vm156 = vcmp.ge.s32.totalorder %v154, 8
  %v157 = vsel %vm155, %v119, %v117
  %v158 = vsel %vm156, %v120, %v118
  %v159 = vor.u32 %v157, 134217728
  %v160 = vor.u32 %v158, 134217728
  %vm161 = vcmp.ge.s32.totalorder %v33, %v159
  %vm162 = vcmp.ge.s32.totalorder %v34, %v159
  %vm163 = vcmp.ge.s32.totalorder %v35, %v159
  %vm164 = vcmp.ge.s32.totalorder %v36, %v160
  %vm165 = vcmp.ge.s32.totalorder %v37, %v160
  %vm166 = vcmp.ge.s32.totalorder %v38, %v160
  %v167 = vsel %vm161, 1, 0
  %v168 = vsel %vm162, 1, 0
  %v169 = vsel %vm163, 1, 0
  %v170 = vsel %vm164, 1, 0
  %v171 = vsel %vm165, 1, 0
  %v172 = vsel %vm166, 1, 0
  %v173 = vsel %vm51, %v167, 0
  %v174 = vsel %vm51, %v168, 0
  %v175 = vsel %vm54, %v169, 0
  %v176 = vadd.s32 %v173, %v175
  %v177 = vadd.s32 %v176, %v174
  %v178 = vrot.slane %v177, 4
  %v179 = vadd.s32 %v177, %v178
  %v180 = vrot.slane %v179, 2
  %v181 = vadd.s32 %v179, %v180
  %v182 = vrot.slane %v181, 1
  %v183 = vadd.s32 %v181, %v182
  %v184 = vsel %vm51, %v170, 0
  %v185 = vsel %vm51, %v171, 0
  %v186 = vsel %vm54, %v172, 0
  %v187 = vadd.s32 %v184, %v186
  %v188 = vadd.s32 %v187, %v185
  %v189 = vrot.slane %v188, 4
  %v190 = vadd.s32 %v188, %v189
  %v191 = vrot.slane %v190, 2
  %v192 = vadd.s32 %v190, %v191
  %v193 = vrot.slane %v192, 1
  %v194 = vadd.s32 %v192, %v193
  %vm195 = vcmp.ge.s32.totalorder %v183, 8
  %vm196 = vcmp.ge.s32.totalorder %v194, 8
  %v197 = vsel %vm195, %v159, %v157
  %v198 = vsel %vm196, %v160, %v158
  %v199 = vor.u32 %v197, 67108864
  %v200 = vor.u32 %v198, 67108864
  %vm201 = vcmp.ge.s32.totalorder %v33, %v199
  %vm202 = vcmp.ge.s32.totalorder %v34, %v199
  %vm203 = vcmp.ge.s32.totalorder %v35, %v199
  %vm204 = vcmp.ge.s32.totalorder %v36, %v200
  %vm205 = vcmp.ge.s32.totalorder %v37, %v200
  %vm206 = vcmp.ge.s32.totalorder %v38, %v200
  %v207 = vsel %vm201, 1, 0
  %v208 = vsel %vm202, 1, 0
  %v209 = vsel %vm203, 1, 0
  %v210 = vsel %vm204, 1, 0
  %v211 = vsel %vm205, 1, 0
  %v212 = vsel %vm206, 1, 0
  %v213 = vsel %vm51, %v207, 0
  %v214 = vsel %vm51, %v208, 0
  %v215 = vsel %vm54, %v209, 0
  %v216 = vadd.s32 %v213, %v215
  %v217 = vadd.s32 %v216, %v214
  %v218 = vrot.slane %v217, 4
  %v219 = vadd.s32 %v217, %v218
  %v220 = vrot.slane %v219, 2
  %v221 = vadd.s32 %v219, %v220
  %v222 = vrot.slane %v221, 1
  %v223 = vadd.s32 %v221, %v222
  %v224 = vsel %vm51, %v210, 0
  %v225 = vsel %vm51, %v211, 0
  %v226 = vsel %vm54, %v212, 0
  %v227 = vadd.s32 %v224, %v226
  %v228 = vadd.s32 %v227, %v225
  %v229 = vrot.slane %v228, 4
  %v230 = vadd.s32 %v228, %v229
  %v231 = vrot.slane %v230, 2
  %v232 = vadd.s32 %v230, %v231
  %v233 = vrot.slane %v232, 1
  %v234 = vadd.s32 %v232, %v233
  %vm235 = vcmp.ge.s32.totalorder %v223, 8
  %vm236 = vcmp.ge.s32.totalorder %v234, 8
  %v237 = vsel %vm235, %v199, %v197
  %v238 = vsel %vm236, %v200, %v198
  %v239 = vor.u32 %v237, 33554432
  %v240 = vor.u32 %v238, 33554432
  %vm241 = vcmp.ge.s32.totalorder %v33, %v239
  %vm242 = vcmp.ge.s32.totalorder %v34, %v239
  %vm243 = vcmp.ge.s32.totalorder %v35, %v239
  %vm244 = vcmp.ge.s32.totalorder %v36, %v240
  %vm245 = vcmp.ge.s32.totalorder %v37, %v240
  %vm246 = vcmp.ge.s32.totalorder %v38, %v240
  %v247 = vsel %vm241, 1, 0
  %v248 = vsel %vm242, 1, 0
  %v249 = vsel %vm243, 1, 0
  %v250 = vsel %vm244, 1, 0
  %v251 = vsel %vm245, 1, 0
  %v252 = vsel %vm246, 1, 0
  %v253 = vsel %vm51, %v247, 0
  %v254 = vsel %vm51, %v248, 0
  %v255 = vsel %vm54, %v249, 0
  %v256 = vadd.s32 %v253, %v255
  %v257 = vadd.s32 %v256, %v254
  %v258 = vrot.slane %v257, 4
  %v259 = vadd.s32 %v257, %v258
  %v260 = vrot.slane %v259, 2
  %v261 = vadd.s32 %v259, %v260
  %v262 = vrot.slane %v261, 1
  %v263 = vadd.s32 %v261, %v262
  %v264 = vsel %vm51, %v250, 0
  %v265 = vsel %vm51, %v251, 0
  %v266 = vsel %vm54, %v252, 0
  %v267 = vadd.s32 %v264, %v266
  %v268 = vadd.s32 %v267, %v265
  %v269 = vrot.slane %v268, 4
  %v270 = vadd.s32 %v268, %v269
  %v271 = vrot.slane %v270, 2
  %v272 = vadd.s32 %v270, %v271
  %v273 = vrot.slane %v272, 1
  %v274 = vadd.s32 %v272, %v273
  %vm275 = vcmp.ge.s32.totalorder %v263, 8
  %vm276 = vcmp.ge.s32.totalorder %v274, 8
  %v277 = vsel %vm275, %v239, %v237
  %v278 = vsel %vm276, %v240, %v238
  %v279 = vor.u32 %v277, 16777216
  %v280 = vor.u32 %v278, 16777216
  %vm281 = vcmp.ge.s32.totalorder %v33, %v279
  %vm282 = vcmp.ge.s32.totalorder %v34, %v279
  %vm283 = vcmp.ge.s32.totalorder %v35, %v279
  %vm284 = vcmp.ge.s32.totalorder %v36, %v280
  %vm285 = vcmp.ge.s32.totalorder %v37, %v280
  %vm286 = vcmp.ge.s32.totalorder %v38, %v280
  %v287 = vsel %vm281, 1, 0
  %v288 = vsel %vm282, 1, 0
  %v289 = vsel %vm283, 1, 0
  %v290 = vsel %vm284, 1, 0
  %v291 = vsel %vm285, 1, 0
  %v292 = vsel %vm286, 1, 0
  %v293 = vsel %vm51, %v287, 0
  %v294 = vsel %vm51, %v288, 0
  %v295 = vsel %vm54, %v289, 0
  %v296 = vadd.s32 %v293, %v295
  %v297 = vadd.s32 %v296, %v294
  %v298 = vrot.slane %v297, 4
  %v299 = vadd.s32 %v297, %v298
  %v300 = vrot.slane %v299, 2
  %v301 = vadd.s32 %v299, %v300
  %v302 = vrot.slane %v301, 1
  %v303 = vadd.s32 %v301, %v302
  %v304 = vsel %vm51, %v290, 0
  %v305 = vsel %vm51, %v291, 0
  %v306 = vsel %vm54, %v292, 0
  %v307 = vadd.s32 %v304, %v306
  %v308 = vadd.s32 %v307, %v305
  %v309 = vrot.slane %v308, 4
  %v310 = vadd.s32 %v308, %v309
  %v311 = vrot.slane %v310, 2
  %v312 = vadd.s32 %v310, %v311
  %v313 = vrot.slane %v312, 1
  %v314 = vadd.s32 %v312, %v313
  %vm315 = vcmp.ge.s32.totalorder %v303, 8
  %vm316 = vcmp.ge.s32.totalorder %v314, 8
  %v317 = vsel %vm315, %v279, %v277
  %v318 = vsel %vm316, %v280, %v278
  %v319 = vor.u32 %v317, 8388608
  %v320 = vor.u32 %v318, 8388608
  %vm321 = vcmp.ge.s32.totalorder %v33, %v319
  %vm322 = vcmp.ge.s32.totalorder %v34, %v319
  %vm323 = vcmp.ge.s32.totalorder %v35, %v319
  %vm324 = vcmp.ge.s32.totalorder %v36, %v320
  %vm325 = vcmp.ge.s32.totalorder %v37, %v320
  %vm326 = vcmp.ge.s32.totalorder %v38, %v320
  %v327 = vsel %vm321, 1, 0
  %v328 = vsel %vm322, 1, 0
  %v329 = vsel %vm323, 1, 0
  %v330 = vsel %vm324, 1, 0
  %v331 = vsel %vm325, 1, 0
  %v332 = vsel %vm326, 1, 0
  %v333 = vsel %vm51, %v327, 0
  %v334 = vsel %vm51, %v328, 0
  %v335 = vsel %vm54, %v329, 0
  %v336 = vadd.s32 %v333, %v335
  %v337 = vadd.s32 %v336, %v334
  %v338 = vrot.slane %v337, 4
  %v339 = vadd.s32 %v337, %v338
  %v340 = vrot.slane %v339, 2
  %v341 = vadd.s32 %v339, %v340
  %v342 = vrot.slane %v341, 1
  %v343 = vadd.s32 %v341, %v342
  %v344 = vsel %vm51, %v330, 0
  %v345 = vsel %vm51, %v331, 0
  %v346 = vsel %vm54, %v332, 0
  %v347 = vadd.s32 %v344, %v346
  %v348 = vadd.s32 %v347, %v345
  %v349 = vrot.slane %v348, 4
  %v350 = vadd.s32 %v348, %v349
  %v351 = vrot.slane %v350, 2
  %v352 = vadd.s32 %v350, %v351
  %v353 = vrot.slane %v352, 1
  %v354 = vadd.s32 %v352, %v353
  %vm355 = vcmp.ge.s32.totalorder %v343, 8
  %vm356 = vcmp.ge.s32.totalorder %v354, 8
  %v357 = vsel %vm355, %v319, %v317
  %v358 = vsel %vm356, %v320, %v318
  %v359 = vor.u32 %v357, 4194304
  %v360 = vor.u32 %v358, 4194304
  %vm361 = vcmp.ge.s32.totalorder %v33, %v359
  %vm362 = vcmp.ge.s32.totalorder %v34, %v359
  %vm363 = vcmp.ge.s32.totalorder %v35, %v359
  %vm364 = vcmp.ge.s32.totalorder %v36, %v360
  %vm365 = vcmp.ge.s32.totalorder %v37, %v360
  %vm366 = vcmp.ge.s32.totalorder %v38, %v360
  %v367 = vsel %vm361, 1, 0
  %v368 = vsel %vm362, 1, 0
  %v369 = vsel %vm363, 1, 0
  %v370 = vsel %vm364, 1, 0
  %v371 = vsel %vm365, 1, 0
  %v372 = vsel %vm366, 1, 0
  %v373 = vsel %vm51, %v367, 0
  %v374 = vsel %vm51, %v368, 0
  %v375 = vsel %vm54, %v369, 0
  %v376 = vadd.s32 %v373, %v375
  %v377 = vadd.s32 %v376, %v374
  %v378 = vrot.slane %v377, 4
  %v379 = vadd.s32 %v377, %v378
  %v380 = vrot.slane %v379, 2
  %v381 = vadd.s32 %v379, %v380
  %v382 = vrot.slane %v381, 1
  %v383 = vadd.s32 %v381, %v382
  %v384 = vsel %vm51, %v370, 0
  %v385 = vsel %vm51, %v371, 0
  %v386 = vsel %vm54, %v372, 0
  %v387 = vadd.s32 %v384, %v386
  %v388 = vadd.s32 %v387, %v385
  %v389 = vrot.slane %v388, 4
  %v390 = vadd.s32 %v388, %v389
  %v391 = vrot.slane %v390, 2
  %v392 = vadd.s32 %v390, %v391
  %v393 = vrot.slane %v392, 1
  %v394 = vadd.s32 %v392, %v393
  %vm395 = vcmp.ge.s32.totalorder %v383, 8
  %vm396 = vcmp.ge.s32.totalorder %v394, 8
  %v397 = vsel %vm395, %v359, %v357
  %v398 = vsel %vm396, %v360, %v358
  %v399 = vor.u32 %v397, 2097152
  %v400 = vor.u32 %v398, 2097152
  %vm401 = vcmp.ge.s32.totalorder %v33, %v399
  %vm402 = vcmp.ge.s32.totalorder %v34, %v399
  %vm403 = vcmp.ge.s32.totalorder %v35, %v399
  %vm404 = vcmp.ge.s32.totalorder %v36, %v400
  %vm405 = vcmp.ge.s32.totalorder %v37, %v400
  %vm406 = vcmp.ge.s32.totalorder %v38, %v400
  %v407 = vsel %vm401, 1, 0
  %v408 = vsel %vm402, 1, 0
  %v409 = vsel %vm403, 1, 0
  %v410 = vsel %vm404, 1, 0
  %v411 = vsel %vm405, 1, 0
  %v412 = vsel %vm406, 1, 0
  %v413 = vsel %vm51, %v407, 0
  %v414 = vsel %vm51, %v408, 0
  %v415 = vsel %vm54, %v409, 0
  %v416 = vadd.s32 %v413, %v415
  %v417 = vadd.s32 %v416, %v414
  %v418 = vrot.slane %v417, 4
  %v419 = vadd.s32 %v417, %v418
  %v420 = vrot.slane %v419, 2
  %v421 = vadd.s32 %v419, %v420
  %v422 = vrot.slane %v421, 1
  %v423 = vadd.s32 %v421, %v422
  %v424 = vsel %vm51, %v410, 0
  %v425 = vsel %vm51, %v411, 0
  %v426 = vsel %vm54, %v412, 0
  %v427 = vadd.s32 %v424, %v426
  %v428 = vadd.s32 %v427, %v425
  %v429 = vrot.slane %v428, 4
  %v430 = vadd.s32 %v428, %v429
  %v431 = vrot.slane %v430, 2
  %v432 = vadd.s32 %v430, %v431
  %v433 = vrot.slane %v432, 1
  %v434 = vadd.s32 %v432, %v433
  %vm435 = vcmp.ge.s32.totalorder %v423, 8
  %vm436 = vcmp.ge.s32.totalorder %v434, 8
  %v437 = vsel %vm435, %v399, %v397
  %v438 = vsel %vm436, %v400, %v398
  %v439 = vor.u32 %v437, 1048576
  %v440 = vor.u32 %v438, 1048576
  %vm441 = vcmp.ge.s32.totalorder %v33, %v439
  %vm442 = vcmp.ge.s32.totalorder %v34, %v439
  %vm443 = vcmp.ge.s32.totalorder %v35, %v439
  %vm444 = vcmp.ge.s32.totalorder %v36, %v440
  %vm445 = vcmp.ge.s32.totalorder %v37, %v440
  %vm446 = vcmp.ge.s32.totalorder %v38, %v440
  %v447 = vsel %vm441, 1, 0
  %v448 = vsel %vm442, 1, 0
  %v449 = vsel %vm443, 1, 0
  %v450 = vsel %vm444, 1, 0
  %v451 = vsel %vm445, 1, 0
  %v452 = vsel %vm446, 1, 0
  %v453 = vsel %vm51, %v447, 0
  %v454 = vsel %vm51, %v448, 0
  %v455 = vsel %vm54, %v449, 0
  %v456 = vadd.s32 %v453, %v455
  %v457 = vadd.s32 %v456, %v454
  %v458 = vrot.slane %v457, 4
  %v459 = vadd.s32 %v457, %v458
  %v460 = vrot.slane %v459, 2
  %v461 = vadd.s32 %v459, %v460
  %v462 = vrot.slane %v461, 1
  %v463 = vadd.s32 %v461, %v462
  %v464 = vsel %vm51, %v450, 0
  %v465 = vsel %vm51, %v451, 0
  %v466 = vsel %vm54, %v452, 0
  %v467 = vadd.s32 %v464, %v466
  %v468 = vadd.s32 %v467, %v465
  %v469 = vrot.slane %v468, 4
  %v470 = vadd.s32 %v468, %v469
  %v471 = vrot.slane %v470, 2
  %v472 = vadd.s32 %v470, %v471
  %v473 = vrot.slane %v472, 1
  %v474 = vadd.s32 %v472, %v473
  %vm475 = vcmp.ge.s32.totalorder %v463, 8
  %vm476 = vcmp.ge.s32.totalorder %v474, 8
  %v477 = vsel %vm475, %v439, %v437
  %v478 = vsel %vm476, %v440, %v438
  %v479 = vor.u32 %v477, 524288
  %v480 = vor.u32 %v478, 524288
  %vm481 = vcmp.ge.s32.totalorder %v33, %v479
  %vm482 = vcmp.ge.s32.totalorder %v34, %v479
  %vm483 = vcmp.ge.s32.totalorder %v35, %v479
  %vm484 = vcmp.ge.s32.totalorder %v36, %v480
  %vm485 = vcmp.ge.s32.totalorder %v37, %v480
  %vm486 = vcmp.ge.s32.totalorder %v38, %v480
  %v487 = vsel %vm481, 1, 0
  %v488 = vsel %vm482, 1, 0
  %v489 = vsel %vm483, 1, 0
  %v490 = vsel %vm484, 1, 0
  %v491 = vsel %vm485, 1, 0
  %v492 = vsel %vm486, 1, 0
  %v493 = vsel %vm51, %v487, 0
  %v494 = vsel %vm51, %v488, 0
  %v495 = vsel %vm54, %v489, 0
  %v496 = vadd.s32 %v493, %v495
  %v497 = vadd.s32 %v496, %v494
  %v498 = vrot.slane %v497, 4
  %v499 = vadd.s32 %v497, %v498
  %v500 = vrot.slane %v499, 2
  %v501 = vadd.s32 %v499, %v500
  %v502 = vrot.slane %v501, 1
  %v503 = vadd.s32 %v501, %v502
  %v504 = vsel %vm51, %v490, 0
  %v505 = vsel %vm51, %v491, 0
  %v506 = vsel %vm54, %v492, 0
  %v507 = vadd.s32 %v504, %v506
  %v508 = vadd.s32 %v507, %v505
  %v509 = vrot.slane %v508, 4
  %v510 = vadd.s32 %v508, %v509
  %v511 = vrot.slane %v510, 2
  %v512 = vadd.s32 %v510, %v511
  %v513 = vrot.slane %v512, 1
  %v514 = vadd.s32 %v512, %v513
  %vm515 = vcmp.ge.s32.totalorder %v503, 8
  %vm516 = vcmp.ge.s32.totalorder %v514, 8
  %v517 = vsel %vm515, %v479, %v477
  %v518 = vsel %vm516, %v480, %v478
  %v519 = vor.u32 %v517, 262144
  %v520 = vor.u32 %v518, 262144
  %vm521 = vcmp.ge.s32.totalorder %v33, %v519
  %vm522 = vcmp.ge.s32.totalorder %v34, %v519
  %vm523 = vcmp.ge.s32.totalorder %v35, %v519
  %vm524 = vcmp.ge.s32.totalorder %v36, %v520
  %vm525 = vcmp.ge.s32.totalorder %v37, %v520
  %vm526 = vcmp.ge.s32.totalorder %v38, %v520
  %v527 = vsel %vm521, 1, 0
  %v528 = vsel %vm522, 1, 0
  %v529 = vsel %vm523, 1, 0
  %v530 = vsel %vm524, 1, 0
  %v531 = vsel %vm525, 1, 0
  %v532 = vsel %vm526, 1, 0
  %v533 = vsel %vm51, %v527, 0
  %v534 = vsel %vm51, %v528, 0
  %v535 = vsel %vm54, %v529, 0
  %v536 = vadd.s32 %v533, %v535
  %v537 = vadd.s32 %v536, %v534
  %v538 = vrot.slane %v537, 4
  %v539 = vadd.s32 %v537, %v538
  %v540 = vrot.slane %v539, 2
  %v541 = vadd.s32 %v539, %v540
  %v542 = vrot.slane %v541, 1
  %v543 = vadd.s32 %v541, %v542
  %v544 = vsel %vm51, %v530, 0
  %v545 = vsel %vm51, %v531, 0
  %v546 = vsel %vm54, %v532, 0
  %v547 = vadd.s32 %v544, %v546
  %v548 = vadd.s32 %v547, %v545
  %v549 = vrot.slane %v548, 4
  %v550 = vadd.s32 %v548, %v549
  %v551 = vrot.slane %v550, 2
  %v552 = vadd.s32 %v550, %v551
  %v553 = vrot.slane %v552, 1
  %v554 = vadd.s32 %v552, %v553
  %vm555 = vcmp.ge.s32.totalorder %v543, 8
  %vm556 = vcmp.ge.s32.totalorder %v554, 8
  %v557 = vsel %vm555, %v519, %v517
  %v558 = vsel %vm556, %v520, %v518
  %v559 = vor.u32 %v557, 131072
  %v560 = vor.u32 %v558, 131072
  %vm561 = vcmp.ge.s32.totalorder %v33, %v559
  %vm562 = vcmp.ge.s32.totalorder %v34, %v559
  %vm563 = vcmp.ge.s32.totalorder %v35, %v559
  %vm564 = vcmp.ge.s32.totalorder %v36, %v560
  %vm565 = vcmp.ge.s32.totalorder %v37, %v560
  %vm566 = vcmp.ge.s32.totalorder %v38, %v560
  %v567 = vsel %vm561, 1, 0
  %v568 = vsel %vm562, 1, 0
  %v569 = vsel %vm563, 1, 0
  %v570 = vsel %vm564, 1, 0
  %v571 = vsel %vm565, 1, 0
  %v572 = vsel %vm566, 1, 0
  %v573 = vsel %vm51, %v567, 0
  %v574 = vsel %vm51, %v568, 0
  %v575 = vsel %vm54, %v569, 0
  %v576 = vadd.s32 %v573, %v575
  %v577 = vadd.s32 %v576, %v574
  %v578 = vrot.slane %v577, 4
  %v579 = vadd.s32 %v577, %v578
  %v580 = vrot.slane %v579, 2
  %v581 = vadd.s32 %v579, %v580
  %v582 = vrot.slane %v581, 1
  %v583 = vadd.s32 %v581, %v582
  %v584 = vsel %vm51, %v570, 0
  %v585 = vsel %vm51, %v571, 0
  %v586 = vsel %vm54, %v572, 0
  %v587 = vadd.s32 %v584, %v586
  %v588 = vadd.s32 %v587, %v585
  %v589 = vrot.slane %v588, 4
  %v590 = vadd.s32 %v588, %v589
  %v591 = vrot.slane %v590, 2
  %v592 = vadd.s32 %v590, %v591
  %v593 = vrot.slane %v592, 1
  %v594 = vadd.s32 %v592, %v593
  %vm595 = vcmp.ge.s32.totalorder %v583, 8
  %vm596 = vcmp.ge.s32.totalorder %v594, 8
  %v597 = vsel %vm595, %v559, %v557
  %v598 = vsel %vm596, %v560, %v558
  %v599 = vor.u32 %v597, 65536
  %v600 = vor.u32 %v598, 65536
  %vm601 = vcmp.ge.s32.totalorder %v33, %v599
  %vm602 = vcmp.ge.s32.totalorder %v34, %v599
  %vm603 = vcmp.ge.s32.totalorder %v35, %v599
  %vm604 = vcmp.ge.s32.totalorder %v36, %v600
  %vm605 = vcmp.ge.s32.totalorder %v37, %v600
  %vm606 = vcmp.ge.s32.totalorder %v38, %v600
  %v607 = vsel %vm601, 1, 0
  %v608 = vsel %vm602, 1, 0
  %v609 = vsel %vm603, 1, 0
  %v610 = vsel %vm604, 1, 0
  %v611 = vsel %vm605, 1, 0
  %v612 = vsel %vm606, 1, 0
  %v613 = vsel %vm51, %v607, 0
  %v614 = vsel %vm51, %v608, 0
  %v615 = vsel %vm54, %v609, 0
  %v616 = vadd.s32 %v613, %v615
  %v617 = vadd.s32 %v616, %v614
  %v618 = vrot.slane %v617, 4
  %v619 = vadd.s32 %v617, %v618
  %v620 = vrot.slane %v619, 2
  %v621 = vadd.s32 %v619, %v620
  %v622 = vrot.slane %v621, 1
  %v623 = vadd.s32 %v621, %v622
  %v624 = vsel %vm51, %v610, 0
  %v625 = vsel %vm51, %v611, 0
  %v626 = vsel %vm54, %v612, 0
  %v627 = vadd.s32 %v624, %v626
  %v628 = vadd.s32 %v627, %v625
  %v629 = vrot.slane %v628, 4
  %v630 = vadd.s32 %v628, %v629
  %v631 = vrot.slane %v630, 2
  %v632 = vadd.s32 %v630, %v631
  %v633 = vrot.slane %v632, 1
  %v634 = vadd.s32 %v632, %v633
  %vm635 = vcmp.ge.s32.totalorder %v623, 8
  %vm636 = vcmp.ge.s32.totalorder %v634, 8
  %v637 = vsel %vm635, %v599, %v597
  %v638 = vsel %vm636, %v600, %v598
  %v639 = vor.u32 %v637, 32768
  %v640 = vor.u32 %v638, 32768
  %vm641 = vcmp.ge.s32.totalorder %v33, %v639
  %vm642 = vcmp.ge.s32.totalorder %v34, %v639
  %vm643 = vcmp.ge.s32.totalorder %v35, %v639
  %vm644 = vcmp.ge.s32.totalorder %v36, %v640
  %vm645 = vcmp.ge.s32.totalorder %v37, %v640
  %vm646 = vcmp.ge.s32.totalorder %v38, %v640
  %v647 = vsel %vm641, 1, 0
  %v648 = vsel %vm642, 1, 0
  %v649 = vsel %vm643, 1, 0
  %v650 = vsel %vm644, 1, 0
  %v651 = vsel %vm645, 1, 0
  %v652 = vsel %vm646, 1, 0
  %v653 = vsel %vm51, %v647, 0
  %v654 = vsel %vm51, %v648, 0
  %v655 = vsel %vm54, %v649, 0
  %v656 = vadd.s32 %v653, %v655
  %v657 = vadd.s32 %v656, %v654
  %v658 = vrot.slane %v657, 4
  %v659 = vadd.s32 %v657, %v658
  %v660 = vrot.slane %v659, 2
  %v661 = vadd.s32 %v659, %v660
  %v662 = vrot.slane %v661, 1
  %v663 = vadd.s32 %v661, %v662
  %v664 = vsel %vm51, %v650, 0
  %v665 = vsel %vm51, %v651, 0
  %v666 = vsel %vm54, %v652, 0
  %v667 = vadd.s32 %v664, %v666
  %v668 = vadd.s32 %v667, %v665
  %v669 = vrot.slane %v668, 4
  %v670 = vadd.s32 %v668, %v669
  %v671 = vrot.slane %v670, 2
  %v672 = vadd.s32 %v670, %v671
  %v673 = vrot.slane %v672, 1
  %v674 = vadd.s32 %v672, %v673
  %vm675 = vcmp.ge.s32.totalorder %v663, 8
  %vm676 = vcmp.ge.s32.totalorder %v674, 8
  %v677 = vsel %vm675, %v639, %v637
  %v678 = vsel %vm676, %v640, %v638
  %v679 = vor.u32 %v677, 16384
  %v680 = vor.u32 %v678, 16384
  %vm681 = vcmp.ge.s32.totalorder %v33, %v679
  %vm682 = vcmp.ge.s32.totalorder %v34, %v679
  %vm683 = vcmp.ge.s32.totalorder %v35, %v679
  %vm684 = vcmp.ge.s32.totalorder %v36, %v680
  %vm685 = vcmp.ge.s32.totalorder %v37, %v680
  %vm686 = vcmp.ge.s32.totalorder %v38, %v680
  %v687 = vsel %vm681, 1, 0
  %v688 = vsel %vm682, 1, 0
  %v689 = vsel %vm683, 1, 0
  %v690 = vsel %vm684, 1, 0
  %v691 = vsel %vm685, 1, 0
  %v692 = vsel %vm686, 1, 0
  %v693 = vsel %vm51, %v687, 0
  %v694 = vsel %vm51, %v688, 0
  %v695 = vsel %vm54, %v689, 0
  %v696 = vadd.s32 %v693, %v695
  %v697 = vadd.s32 %v696, %v694
  %v698 = vrot.slane %v697, 4
  %v699 = vadd.s32 %v697, %v698
  %v700 = vrot.slane %v699, 2
  %v701 = vadd.s32 %v699, %v700
  %v702 = vrot.slane %v701, 1
  %v703 = vadd.s32 %v701, %v702
  %v704 = vsel %vm51, %v690, 0
  %v705 = vsel %vm51, %v691, 0
  %v706 = vsel %vm54, %v692, 0
  %v707 = vadd.s32 %v704, %v706
  %v708 = vadd.s32 %v707, %v705
  %v709 = vrot.slane %v708, 4
  %v710 = vadd.s32 %v708, %v709
  %v711 = vrot.slane %v710, 2
  %v712 = vadd.s32 %v710, %v711
  %v713 = vrot.slane %v712, 1
  %v714 = vadd.s32 %v712, %v713
  %vm715 = vcmp.ge.s32.totalorder %v703, 8
  %vm716 = vcmp.ge.s32.totalorder %v714, 8
  %v717 = vsel %vm715, %v679, %v677
  %v718 = vsel %vm716, %v680, %v678
  %v719 = vor.u32 %v717, 8192
  %v720 = vor.u32 %v718, 8192
  %vm721 = vcmp.ge.s32.totalorder %v33, %v719
  %vm722 = vcmp.ge.s32.totalorder %v34, %v719
  %vm723 = vcmp.ge.s32.totalorder %v35, %v719
  %vm724 = vcmp.ge.s32.totalorder %v36, %v720
  %vm725 = vcmp.ge.s32.totalorder %v37, %v720
  %vm726 = vcmp.ge.s32.totalorder %v38, %v720
  %v727 = vsel %vm721, 1, 0
  %v728 = vsel %vm722, 1, 0
  %v729 = vsel %vm723, 1, 0
  %v730 = vsel %vm724, 1, 0
  %v731 = vsel %vm725, 1, 0
  %v732 = vsel %vm726, 1, 0
  %v733 = vsel %vm51, %v727, 0
  %v734 = vsel %vm51, %v728, 0
  %v735 = vsel %vm54, %v729, 0
  %v736 = vadd.s32 %v733, %v735
  %v737 = vadd.s32 %v736, %v734
  %v738 = vrot.slane %v737, 4
  %v739 = vadd.s32 %v737, %v738
  %v740 = vrot.slane %v739, 2
  %v741 = vadd.s32 %v739, %v740
  %v742 = vrot.slane %v741, 1
  %v743 = vadd.s32 %v741, %v742
  %v744 = vsel %vm51, %v730, 0
  %v745 = vsel %vm51, %v731, 0
  %v746 = vsel %vm54, %v732, 0
  %v747 = vadd.s32 %v744, %v746
  %v748 = vadd.s32 %v747, %v745
  %v749 = vrot.slane %v748, 4
  %v750 = vadd.s32 %v748, %v749
  %v751 = vrot.slane %v750, 2
  %v752 = vadd.s32 %v750, %v751
  %v753 = vrot.slane %v752, 1
  %v754 = vadd.s32 %v752, %v753
  %vm755 = vcmp.ge.s32.totalorder %v743, 8
  %vm756 = vcmp.ge.s32.totalorder %v754, 8
  %v757 = vsel %vm755, %v719, %v717
  %v758 = vsel %vm756, %v720, %v718
  %v759 = vor.u32 %v757, 4096
  %v760 = vor.u32 %v758, 4096
  %vm761 = vcmp.ge.s32.totalorder %v33, %v759
  %vm762 = vcmp.ge.s32.totalorder %v34, %v759
  %vm763 = vcmp.ge.s32.totalorder %v35, %v759
  %vm764 = vcmp.ge.s32.totalorder %v36, %v760
  %vm765 = vcmp.ge.s32.totalorder %v37, %v760
  %vm766 = vcmp.ge.s32.totalorder %v38, %v760
  %v767 = vsel %vm761, 1, 0
  %v768 = vsel %vm762, 1, 0
  %v769 = vsel %vm763, 1, 0
  %v770 = vsel %vm764, 1, 0
  %v771 = vsel %vm765, 1, 0
  %v772 = vsel %vm766, 1, 0
  %v773 = vsel %vm51, %v767, 0
  %v774 = vsel %vm51, %v768, 0
  %v775 = vsel %vm54, %v769, 0
  %v776 = vadd.s32 %v773, %v775
  %v777 = vadd.s32 %v776, %v774
  %v778 = vrot.slane %v777, 4
  %v779 = vadd.s32 %v777, %v778
  %v780 = vrot.slane %v779, 2
  %v781 = vadd.s32 %v779, %v780
  %v782 = vrot.slane %v781, 1
  %v783 = vadd.s32 %v781, %v782
  %v784 = vsel %vm51, %v770, 0
  %v785 = vsel %vm51, %v771, 0
  %v786 = vsel %vm54, %v772, 0
  %v787 = vadd.s32 %v784, %v786
  %v788 = vadd.s32 %v787, %v785
  %v789 = vrot.slane %v788, 4
  %v790 = vadd.s32 %v788, %v789
  %v791 = vrot.slane %v790, 2
  %v792 = vadd.s32 %v790, %v791
  %v793 = vrot.slane %v792, 1
  %v794 = vadd.s32 %v792, %v793
  %vm795 = vcmp.ge.s32.totalorder %v783, 8
  %vm796 = vcmp.ge.s32.totalorder %v794, 8
  %v797 = vsel %vm795, %v759, %v757
  %v798 = vsel %vm796, %v760, %v758
  %v799 = vor.u32 %v797, 2048
  %v800 = vor.u32 %v798, 2048
  %vm801 = vcmp.ge.s32.totalorder %v33, %v799
  %vm802 = vcmp.ge.s32.totalorder %v34, %v799
  %vm803 = vcmp.ge.s32.totalorder %v35, %v799
  %vm804 = vcmp.ge.s32.totalorder %v36, %v800
  %vm805 = vcmp.ge.s32.totalorder %v37, %v800
  %vm806 = vcmp.ge.s32.totalorder %v38, %v800
  %v807 = vsel %vm801, 1, 0
  %v808 = vsel %vm802, 1, 0
  %v809 = vsel %vm803, 1, 0
  %v810 = vsel %vm804, 1, 0
  %v811 = vsel %vm805, 1, 0
  %v812 = vsel %vm806, 1, 0
  %v813 = vsel %vm51, %v807, 0
  %v814 = vsel %vm51, %v808, 0
  %v815 = vsel %vm54, %v809, 0
  %v816 = vadd.s32 %v813, %v815
  %v817 = vadd.s32 %v816, %v814
  %v818 = vrot.slane %v817, 4
  %v819 = vadd.s32 %v817, %v818
  %v820 = vrot.slane %v819, 2
  %v821 = vadd.s32 %v819, %v820
  %v822 = vrot.slane %v821, 1
  %v823 = vadd.s32 %v821, %v822
  %v824 = vsel %vm51, %v810, 0
  %v825 = vsel %vm51, %v811, 0
  %v826 = vsel %vm54, %v812, 0
  %v827 = vadd.s32 %v824, %v826
  %v828 = vadd.s32 %v827, %v825
  %v829 = vrot.slane %v828, 4
  %v830 = vadd.s32 %v828, %v829
  %v831 = vrot.slane %v830, 2
  %v832 = vadd.s32 %v830, %v831
  %v833 = vrot.slane %v832, 1
  %v834 = vadd.s32 %v832, %v833
  %vm835 = vcmp.ge.s32.totalorder %v823, 8
  %vm836 = vcmp.ge.s32.totalorder %v834, 8
  %v837 = vsel %vm835, %v799, %v797
  %v838 = vsel %vm836, %v800, %v798
  %v839 = vor.u32 %v837, 1024
  %v840 = vor.u32 %v838, 1024
  %vm841 = vcmp.ge.s32.totalorder %v33, %v839
  %vm842 = vcmp.ge.s32.totalorder %v34, %v839
  %vm843 = vcmp.ge.s32.totalorder %v35, %v839
  %vm844 = vcmp.ge.s32.totalorder %v36, %v840
  %vm845 = vcmp.ge.s32.totalorder %v37, %v840
  %vm846 = vcmp.ge.s32.totalorder %v38, %v840
  %v847 = vsel %vm841, 1, 0
  %v848 = vsel %vm842, 1, 0
  %v849 = vsel %vm843, 1, 0
  %v850 = vsel %vm844, 1, 0
  %v851 = vsel %vm845, 1, 0
  %v852 = vsel %vm846, 1, 0
  %v853 = vsel %vm51, %v847, 0
  %v854 = vsel %vm51, %v848, 0
  %v855 = vsel %vm54, %v849, 0
  %v856 = vadd.s32 %v853, %v855
  %v857 = vadd.s32 %v856, %v854
  %v858 = vrot.slane %v857, 4
  %v859 = vadd.s32 %v857, %v858
  %v860 = vrot.slane %v859, 2
  %v861 = vadd.s32 %v859, %v860
  %v862 = vrot.slane %v861, 1
  %v863 = vadd.s32 %v861, %v862
  %v864 = vsel %vm51, %v850, 0
  %v865 = vsel %vm51, %v851, 0
  %v866 = vsel %vm54, %v852, 0
  %v867 = vadd.s32 %v864, %v866
  %v868 = vadd.s32 %v867, %v865
  %v869 = vrot.slane %v868, 4
  %v870 = vadd.s32 %v868, %v869
  %v871 = vrot.slane %v870, 2
  %v872 = vadd.s32 %v870, %v871
  %v873 = vrot.slane %v872, 1
  %v874 = vadd.s32 %v872, %v873
  %vm875 = vcmp.ge.s32.totalorder %v863, 8
  %vm876 = vcmp.ge.s32.totalorder %v874, 8
  %v877 = vsel %vm875, %v839, %v837
  %v878 = vsel %vm876, %v840, %v838
  %v879 = vor.u32 %v877, 512
  %v880 = vor.u32 %v878, 512
  %vm881 = vcmp.ge.s32.totalorder %v33, %v879
  %vm882 = vcmp.ge.s32.totalorder %v34, %v879
  %vm883 = vcmp.ge.s32.totalorder %v35, %v879
  %vm884 = vcmp.ge.s32.totalorder %v36, %v880
  %vm885 = vcmp.ge.s32.totalorder %v37, %v880
  %vm886 = vcmp.ge.s32.totalorder %v38, %v880
  %v887 = vsel %vm881, 1, 0
  %v888 = vsel %vm882, 1, 0
  %v889 = vsel %vm883, 1, 0
  %v890 = vsel %vm884, 1, 0
  %v891 = vsel %vm885, 1, 0
  %v892 = vsel %vm886, 1, 0
  %v893 = vsel %vm51, %v887, 0
  %v894 = vsel %vm51, %v888, 0
  %v895 = vsel %vm54, %v889, 0
  %v896 = vadd.s32 %v893, %v895
  %v897 = vadd.s32 %v896, %v894
  %v898 = vrot.slane %v897, 4
  %v899 = vadd.s32 %v897, %v898
  %v900 = vrot.slane %v899, 2
  %v901 = vadd.s32 %v899, %v900
  %v902 = vrot.slane %v901, 1
  %v903 = vadd.s32 %v901, %v902
  %v904 = vsel %vm51, %v890, 0
  %v905 = vsel %vm51, %v891, 0
  %v906 = vsel %vm54, %v892, 0
  %v907 = vadd.s32 %v904, %v906
  %v908 = vadd.s32 %v907, %v905
  %v909 = vrot.slane %v908, 4
  %v910 = vadd.s32 %v908, %v909
  %v911 = vrot.slane %v910, 2
  %v912 = vadd.s32 %v910, %v911
  %v913 = vrot.slane %v912, 1
  %v914 = vadd.s32 %v912, %v913
  %vm915 = vcmp.ge.s32.totalorder %v903, 8
  %vm916 = vcmp.ge.s32.totalorder %v914, 8
  %v917 = vsel %vm915, %v879, %v877
  %v918 = vsel %vm916, %v880, %v878
  %v919 = vor.u32 %v917, 256
  %v920 = vor.u32 %v918, 256
  %vm921 = vcmp.ge.s32.totalorder %v33, %v919
  %vm922 = vcmp.ge.s32.totalorder %v34, %v919
  %vm923 = vcmp.ge.s32.totalorder %v35, %v919
  %vm924 = vcmp.ge.s32.totalorder %v36, %v920
  %vm925 = vcmp.ge.s32.totalorder %v37, %v920
  %vm926 = vcmp.ge.s32.totalorder %v38, %v920
  %v927 = vsel %vm921, 1, 0
  %v928 = vsel %vm922, 1, 0
  %v929 = vsel %vm923, 1, 0
  %v930 = vsel %vm924, 1, 0
  %v931 = vsel %vm925, 1, 0
  %v932 = vsel %vm926, 1, 0
  %v933 = vsel %vm51, %v927, 0
  %v934 = vsel %vm51, %v928, 0
  %v935 = vsel %vm54, %v929, 0
  %v936 = vadd.s32 %v933, %v935
  %v937 = vadd.s32 %v936, %v934
  %v938 = vrot.slane %v937, 4
  %v939 = vadd.s32 %v937, %v938
  %v940 = vrot.slane %v939, 2
  %v941 = vadd.s32 %v939, %v940
  %v942 = vrot.slane %v941, 1
  %v943 = vadd.s32 %v941, %v942
  %v944 = vsel %vm51, %v930, 0
  %v945 = vsel %vm51, %v931, 0
  %v946 = vsel %vm54, %v932, 0
  %v947 = vadd.s32 %v944, %v946
  %v948 = vadd.s32 %v947, %v945
  %v949 = vrot.slane %v948, 4
  %v950 = vadd.s32 %v948, %v949
  %v951 = vrot.slane %v950, 2
  %v952 = vadd.s32 %v950, %v951
  %v953 = vrot.slane %v952, 1
  %v954 = vadd.s32 %v952, %v953
  %vm955 = vcmp.ge.s32.totalorder %v943, 8
  %vm956 = vcmp.ge.s32.totalorder %v954, 8
  %v957 = vsel %vm955, %v919, %v917
  %v958 = vsel %vm956, %v920, %v918
  %v959 = vor.u32 %v957, 128
  %v960 = vor.u32 %v958, 128
  %vm961 = vcmp.ge.s32.totalorder %v33, %v959
  %vm962 = vcmp.ge.s32.totalorder %v34, %v959
  %vm963 = vcmp.ge.s32.totalorder %v35, %v959
  %vm964 = vcmp.ge.s32.totalorder %v36, %v960
  %vm965 = vcmp.ge.s32.totalorder %v37, %v960
  %vm966 = vcmp.ge.s32.totalorder %v38, %v960
  %v967 = vsel %vm961, 1, 0
  %v968 = vsel %vm962, 1, 0
  %v969 = vsel %vm963, 1, 0
  %v970 = vsel %vm964, 1, 0
  %v971 = vsel %vm965, 1, 0
  %v972 = vsel %vm966, 1, 0
  %v973 = vsel %vm51, %v967, 0
  %v974 = vsel %vm51, %v968, 0
  %v975 = vsel %vm54, %v969, 0
  %v976 = vadd.s32 %v973, %v975
  %v977 = vadd.s32 %v976, %v974
  %v978 = vrot.slane %v977, 4
  %v979 = vadd.s32 %v977, %v978
  %v980 = vrot.slane %v979, 2
  %v981 = vadd.s32 %v979, %v980
  %v982 = vrot.slane %v981, 1
  %v983 = vadd.s32 %v981, %v982
  %v984 = vsel %vm51, %v970, 0
  %v985 = vsel %vm51, %v971, 0
  %v986 = vsel %vm54, %v972, 0
  %v987 = vadd.s32 %v984, %v986
  %v988 = vadd.s32 %v987, %v985
  %v989 = vrot.slane %v988, 4
  %v990 = vadd.s32 %v988, %v989
  %v991 = vrot.slane %v990, 2
  %v992 = vadd.s32 %v990, %v991
  %v993 = vrot.slane %v992, 1
  %v994 = vadd.s32 %v992, %v993
  %vm995 = vcmp.ge.s32.totalorder %v983, 8
  %vm996 = vcmp.ge.s32.totalorder %v994, 8
  %v997 = vsel %vm995, %v959, %v957
  %v998 = vsel %vm996, %v960, %v958
  %v999 = vor.u32 %v997, 64
  %v1000 = vor.u32 %v998, 64
  %vm1001 = vcmp.ge.s32.totalorder %v33, %v999
  %vm1002 = vcmp.ge.s32.totalorder %v34, %v999
  %vm1003 = vcmp.ge.s32.totalorder %v35, %v999
  %vm1004 = vcmp.ge.s32.totalorder %v36, %v1000
  %vm1005 = vcmp.ge.s32.totalorder %v37, %v1000
  %vm1006 = vcmp.ge.s32.totalorder %v38, %v1000
  %v1007 = vsel %vm1001, 1, 0
  %v1008 = vsel %vm1002, 1, 0
  %v1009 = vsel %vm1003, 1, 0
  %v1010 = vsel %vm1004, 1, 0
  %v1011 = vsel %vm1005, 1, 0
  %v1012 = vsel %vm1006, 1, 0
  %v1013 = vsel %vm51, %v1007, 0
  %v1014 = vsel %vm51, %v1008, 0
  %v1015 = vsel %vm54, %v1009, 0
  %v1016 = vadd.s32 %v1013, %v1015
  %v1017 = vadd.s32 %v1016, %v1014
  %v1018 = vrot.slane %v1017, 4
  %v1019 = vadd.s32 %v1017, %v1018
  %v1020 = vrot.slane %v1019, 2
  %v1021 = vadd.s32 %v1019, %v1020
  %v1022 = vrot.slane %v1021, 1
  %v1023 = vadd.s32 %v1021, %v1022
  %v1024 = vsel %vm51, %v1010, 0
  %v1025 = vsel %vm51, %v1011, 0
  %v1026 = vsel %vm54, %v1012, 0
  %v1027 = vadd.s32 %v1024, %v1026
  %v1028 = vadd.s32 %v1027, %v1025
  %v1029 = vrot.slane %v1028, 4
  %v1030 = vadd.s32 %v1028, %v1029
  %v1031 = vrot.slane %v1030, 2
  %v1032 = vadd.s32 %v1030, %v1031
  %v1033 = vrot.slane %v1032, 1
  %v1034 = vadd.s32 %v1032, %v1033
  %vm1035 = vcmp.ge.s32.totalorder %v1023, 8
  %vm1036 = vcmp.ge.s32.totalorder %v1034, 8
  %v1037 = vsel %vm1035, %v999, %v997
  %v1038 = vsel %vm1036, %v1000, %v998
  %v1039 = vor.u32 %v1037, 32
  %v1040 = vor.u32 %v1038, 32
  %vm1041 = vcmp.ge.s32.totalorder %v33, %v1039
  %vm1042 = vcmp.ge.s32.totalorder %v34, %v1039
  %vm1043 = vcmp.ge.s32.totalorder %v35, %v1039
  %vm1044 = vcmp.ge.s32.totalorder %v36, %v1040
  %vm1045 = vcmp.ge.s32.totalorder %v37, %v1040
  %vm1046 = vcmp.ge.s32.totalorder %v38, %v1040
  %v1047 = vsel %vm1041, 1, 0
  %v1048 = vsel %vm1042, 1, 0
  %v1049 = vsel %vm1043, 1, 0
  %v1050 = vsel %vm1044, 1, 0
  %v1051 = vsel %vm1045, 1, 0
  %v1052 = vsel %vm1046, 1, 0
  %v1053 = vsel %vm51, %v1047, 0
  %v1054 = vsel %vm51, %v1048, 0
  %v1055 = vsel %vm54, %v1049, 0
  %v1056 = vadd.s32 %v1053, %v1055
  %v1057 = vadd.s32 %v1056, %v1054
  %v1058 = vrot.slane %v1057, 4
  %v1059 = vadd.s32 %v1057, %v1058
  %v1060 = vrot.slane %v1059, 2
  %v1061 = vadd.s32 %v1059, %v1060
  %v1062 = vrot.slane %v1061, 1
  %v1063 = vadd.s32 %v1061, %v1062
  %v1064 = vsel %vm51, %v1050, 0
  %v1065 = vsel %vm51, %v1051, 0
  %v1066 = vsel %vm54, %v1052, 0
  %v1067 = vadd.s32 %v1064, %v1066
  %v1068 = vadd.s32 %v1067, %v1065
  %v1069 = vrot.slane %v1068, 4
  %v1070 = vadd.s32 %v1068, %v1069
  %v1071 = vrot.slane %v1070, 2
  %v1072 = vadd.s32 %v1070, %v1071
  %v1073 = vrot.slane %v1072, 1
  %v1074 = vadd.s32 %v1072, %v1073
  %vm1075 = vcmp.ge.s32.totalorder %v1063, 8
  %vm1076 = vcmp.ge.s32.totalorder %v1074, 8
  %v1077 = vsel %vm1075, %v1039, %v1037
  %v1078 = vsel %vm1076, %v1040, %v1038
  %v1079 = vor.u32 %v1077, 16
  %v1080 = vor.u32 %v1078, 16
  %vm1081 = vcmp.ge.s32.totalorder %v33, %v1079
  %vm1082 = vcmp.ge.s32.totalorder %v34, %v1079
  %vm1083 = vcmp.ge.s32.totalorder %v35, %v1079
  %vm1084 = vcmp.ge.s32.totalorder %v36, %v1080
  %vm1085 = vcmp.ge.s32.totalorder %v37, %v1080
  %vm1086 = vcmp.ge.s32.totalorder %v38, %v1080
  %v1087 = vsel %vm1081, 1, 0
  %v1088 = vsel %vm1082, 1, 0
  %v1089 = vsel %vm1083, 1, 0
  %v1090 = vsel %vm1084, 1, 0
  %v1091 = vsel %vm1085, 1, 0
  %v1092 = vsel %vm1086, 1, 0
  %v1093 = vsel %vm51, %v1087, 0
  %v1094 = vsel %vm51, %v1088, 0
  %v1095 = vsel %vm54, %v1089, 0
  %v1096 = vadd.s32 %v1093, %v1095
  %v1097 = vadd.s32 %v1096, %v1094
  %v1098 = vrot.slane %v1097, 4
  %v1099 = vadd.s32 %v1097, %v1098
  %v1100 = vrot.slane %v1099, 2
  %v1101 = vadd.s32 %v1099, %v1100
  %v1102 = vrot.slane %v1101, 1
  %v1103 = vadd.s32 %v1101, %v1102
  %v1104 = vsel %vm51, %v1090, 0
  %v1105 = vsel %vm51, %v1091, 0
  %v1106 = vsel %vm54, %v1092, 0
  %v1107 = vadd.s32 %v1104, %v1106
  %v1108 = vadd.s32 %v1107, %v1105
  %v1109 = vrot.slane %v1108, 4
  %v1110 = vadd.s32 %v1108, %v1109
  %v1111 = vrot.slane %v1110, 2
  %v1112 = vadd.s32 %v1110, %v1111
  %v1113 = vrot.slane %v1112, 1
  %v1114 = vadd.s32 %v1112, %v1113
  %vm1115 = vcmp.ge.s32.totalorder %v1103, 8
  %vm1116 = vcmp.ge.s32.totalorder %v1114, 8
  %v1117 = vsel %vm1115, %v1079, %v1077
  %v1118 = vsel %vm1116, %v1080, %v1078
  %v1119 = vor.u32 %v1117, 8
  %v1120 = vor.u32 %v1118, 8
  %vm1121 = vcmp.ge.s32.totalorder %v33, %v1119
  %vm1122 = vcmp.ge.s32.totalorder %v34, %v1119
  %vm1123 = vcmp.ge.s32.totalorder %v35, %v1119
  %vm1124 = vcmp.ge.s32.totalorder %v36, %v1120
  %vm1125 = vcmp.ge.s32.totalorder %v37, %v1120
  %vm1126 = vcmp.ge.s32.totalorder %v38, %v1120
  %v1127 = vsel %vm1121, 1, 0
  %v1128 = vsel %vm1122, 1, 0
  %v1129 = vsel %vm1123, 1, 0
  %v1130 = vsel %vm1124, 1, 0
  %v1131 = vsel %vm1125, 1, 0
  %v1132 = vsel %vm1126, 1, 0
  %v1133 = vsel %vm51, %v1127, 0
  %v1134 = vsel %vm51, %v1128, 0
  %v1135 = vsel %vm54, %v1129, 0
  %v1136 = vadd.s32 %v1133, %v1135
  %v1137 = vadd.s32 %v1136, %v1134
  %v1138 = vrot.slane %v1137, 4
  %v1139 = vadd.s32 %v1137, %v1138
  %v1140 = vrot.slane %v1139, 2
  %v1141 = vadd.s32 %v1139, %v1140
  %v1142 = vrot.slane %v1141, 1
  %v1143 = vadd.s32 %v1141, %v1142
  %v1144 = vsel %vm51, %v1130, 0
  %v1145 = vsel %vm51, %v1131, 0
  %v1146 = vsel %vm54, %v1132, 0
  %v1147 = vadd.s32 %v1144, %v1146
  %v1148 = vadd.s32 %v1147, %v1145
  %v1149 = vrot.slane %v1148, 4
  %v1150 = vadd.s32 %v1148, %v1149
  %v1151 = vrot.slane %v1150, 2
  %v1152 = vadd.s32 %v1150, %v1151
  %v1153 = vrot.slane %v1152, 1
  %v1154 = vadd.s32 %v1152, %v1153
  %vm1155 = vcmp.ge.s32.totalorder %v1143, 8
  %vm1156 = vcmp.ge.s32.totalorder %v1154, 8
  %v1157 = vsel %vm1155, %v1119, %v1117
  %v1158 = vsel %vm1156, %v1120, %v1118
  %v1159 = vor.u32 %v1157, 4
  %v1160 = vor.u32 %v1158, 4
  %vm1161 = vcmp.ge.s32.totalorder %v33, %v1159
  %vm1162 = vcmp.ge.s32.totalorder %v34, %v1159
  %vm1163 = vcmp.ge.s32.totalorder %v35, %v1159
  %vm1164 = vcmp.ge.s32.totalorder %v36, %v1160
  %vm1165 = vcmp.ge.s32.totalorder %v37, %v1160
  %vm1166 = vcmp.ge.s32.totalorder %v38, %v1160
  %v1167 = vsel %vm1161, 1, 0
  %v1168 = vsel %vm1162, 1, 0
  %v1169 = vsel %vm1163, 1, 0
  %v1170 = vsel %vm1164, 1, 0
  %v1171 = vsel %vm1165, 1, 0
  %v1172 = vsel %vm1166, 1, 0
  %v1173 = vsel %vm51, %v1167, 0
  %v1174 = vsel %vm51, %v1168, 0
  %v1175 = vsel %vm54, %v1169, 0
  %v1176 = vadd.s32 %v1173, %v1175
  %v1177 = vadd.s32 %v1176, %v1174
  %v1178 = vrot.slane %v1177, 4
  %v1179 = vadd.s32 %v1177, %v1178
  %v1180 = vrot.slane %v1179, 2
  %v1181 = vadd.s32 %v1179, %v1180
  %v1182 = vrot.slane %v1181, 1
  %v1183 = vadd.s32 %v1181, %v1182
  %v1184 = vsel %vm51, %v1170, 0
  %v1185 = vsel %vm51, %v1171, 0
  %v1186 = vsel %vm54, %v1172, 0
  %v1187 = vadd.s32 %v1184, %v1186
  %v1188 = vadd.s32 %v1187, %v1185
  %v1189 = vrot.slane %v1188, 4
  %v1190 = vadd.s32 %v1188, %v1189
  %v1191 = vrot.slane %v1190, 2
  %v1192 = vadd.s32 %v1190, %v1191
  %v1193 = vrot.slane %v1192, 1
  %v1194 = vadd.s32 %v1192, %v1193
  %vm1195 = vcmp.ge.s32.totalorder %v1183, 8
  %vm1196 = vcmp.ge.s32.totalorder %v1194, 8
  %v1197 = vsel %vm1195, %v1159, %v1157
  %v1198 = vsel %vm1196, %v1160, %v1158
  %v1199 = vor.u32 %v1197, 2
  %v1200 = vor.u32 %v1198, 2
  %vm1201 = vcmp.ge.s32.totalorder %v33, %v1199
  %vm1202 = vcmp.ge.s32.totalorder %v34, %v1199
  %vm1203 = vcmp.ge.s32.totalorder %v35, %v1199
  %vm1204 = vcmp.ge.s32.totalorder %v36, %v1200
  %vm1205 = vcmp.ge.s32.totalorder %v37, %v1200
  %vm1206 = vcmp.ge.s32.totalorder %v38, %v1200
  %v1207 = vsel %vm1201, 1, 0
  %v1208 = vsel %vm1202, 1, 0
  %v1209 = vsel %vm1203, 1, 0
  %v1210 = vsel %vm1204, 1, 0
  %v1211 = vsel %vm1205, 1, 0
  %v1212 = vsel %vm1206, 1, 0
  %v1213 = vsel %vm51, %v1207, 0
  %v1214 = vsel %vm51, %v1208, 0
  %v1215 = vsel %vm54, %v1209, 0
  %v1216 = vadd.s32 %v1213, %v1215
  %v1217 = vadd.s32 %v1216, %v1214
  %v1218 = vrot.slane %v1217, 4
  %v1219 = vadd.s32 %v1217, %v1218
  %v1220 = vrot.slane %v1219, 2
  %v1221 = vadd.s32 %v1219, %v1220
  %v1222 = vrot.slane %v1221, 1
  %v1223 = vadd.s32 %v1221, %v1222
  %v1224 = vsel %vm51, %v1210, 0
  %v1225 = vsel %vm51, %v1211, 0
  %v1226 = vsel %vm54, %v1212, 0
  %v1227 = vadd.s32 %v1224, %v1226
  %v1228 = vadd.s32 %v1227, %v1225
  %v1229 = vrot.slane %v1228, 4
  %v1230 = vadd.s32 %v1228, %v1229
  %v1231 = vrot.slane %v1230, 2
  %v1232 = vadd.s32 %v1230, %v1231
  %v1233 = vrot.slane %v1232, 1
  %v1234 = vadd.s32 %v1232, %v1233
  %vm1235 = vcmp.ge.s32.totalorder %v1223, 8
  %vm1236 = vcmp.ge.s32.totalorder %v1234, 8
  %v1237 = vsel %vm1235, %v1199, %v1197
  %v1238 = vsel %vm1236, %v1200, %v1198
  %v1239 = vor.u32 %v1237, 1
  %v1240 = vor.u32 %v1238, 1
  %vm1241 = vcmp.ge.s32.totalorder %v33, %v1239
  %vm1242 = vcmp.ge.s32.totalorder %v34, %v1239
  %vm1243 = vcmp.ge.s32.totalorder %v35, %v1239
  %vm1244 = vcmp.ge.s32.totalorder %v36, %v1240
  %vm1245 = vcmp.ge.s32.totalorder %v37, %v1240
  %vm1246 = vcmp.ge.s32.totalorder %v38, %v1240
  %v1247 = vsel %vm1241, 1, 0
  %v1248 = vsel %vm1242, 1, 0
  %v1249 = vsel %vm1243, 1, 0
  %v1250 = vsel %vm1244, 1, 0
  %v1251 = vsel %vm1245, 1, 0
  %v1252 = vsel %vm1246, 1, 0
  %v1253 = vsel %vm51, %v1247, 0
  %v1254 = vsel %vm51, %v1248, 0
  %v1255 = vsel %vm54, %v1249, 0
  %v1256 = vadd.s32 %v1253, %v1255
  %v1257 = vadd.s32 %v1256, %v1254
  %v1258 = vrot.slane %v1257, 4
  %v1259 = vadd.s32 %v1257, %v1258
  %v1260 = vrot.slane %v1259, 2
  %v1261 = vadd.s32 %v1259, %v1260
  %v1262 = vrot.slane %v1261, 1
  %v1263 = vadd.s32 %v1261, %v1262
  %v1264 = vsel %vm51, %v1250, 0
  %v1265 = vsel %vm51, %v1251, 0
  %v1266 = vsel %vm54, %v1252, 0
  %v1267 = vadd.s32 %v1264, %v1266
  %v1268 = vadd.s32 %v1267, %v1265
  %v1269 = vrot.slane %v1268, 4
  %v1270 = vadd.s32 %v1268, %v1269
  %v1271 = vrot.slane %v1270, 2
  %v1272 = vadd.s32 %v1270, %v1271
  %v1273 = vrot.slane %v1272, 1
  %v1274 = vadd.s32 %v1272, %v1273
  %vm1275 = vcmp.ge.s32.totalorder %v1263, 8
  %vm1276 = vcmp.ge.s32.totalorder %v1274, 8
  %v1277 = vsel %vm1275, %v1239, %v1237
  %v1278 = vsel %vm1276, %v1240, %v1238
  %vm1279 = vcmp.gt.s32.totalorder %v33, %v1277
  %vm1280 = vcmp.gt.s32.totalorder %v34, %v1277
  %vm1281 = vcmp.gt.s32.totalorder %v35, %v1277
  %vm1282 = vcmp.gt.s32.totalorder %v36, %v1278
  %vm1283 = vcmp.gt.s32.totalorder %v37, %v1278
  %vm1284 = vcmp.gt.s32.totalorder %v38, %v1278
  %vm1285 = vcmp.eq.s32.totalorder %v33, %v1277
  %vm1286 = vcmp.eq.s32.totalorder %v34, %v1277
  %vm1287 = vcmp.eq.s32.totalorder %v35, %v1277
  %vm1288 = vcmp.eq.s32.totalorder %v36, %v1278
  %vm1289 = vcmp.eq.s32.totalorder %v37, %v1278
  %vm1290 = vcmp.eq.s32.totalorder %v38, %v1278
  %v1291 = vsel %vm1279, 1, 0
  %v1292 = vsel %vm1280, 1, 0
  %v1293 = vsel %vm1281, 1, 0
  %v1294 = vsel %vm1282, 1, 0
  %v1295 = vsel %vm1283, 1, 0
  %v1296 = vsel %vm1284, 1, 0
  %v1297 = vsel %vm51, %v1291, 0
  %v1298 = vsel %vm51, %v1292, 0
  %v1299 = vsel %vm54, %v1293, 0
  %v1300 = vadd.s32 %v1297, %v1299
  %v1301 = vadd.s32 %v1300, %v1298
  %v1302 = vrot.slane %v1301, 4
  %v1303 = vadd.s32 %v1301, %v1302
  %v1304 = vrot.slane %v1303, 2
  %v1305 = vadd.s32 %v1303, %v1304
  %v1306 = vrot.slane %v1305, 1
  %v1307 = vadd.s32 %v1305, %v1306
  %v1308 = vsel %vm51, %v1294, 0
  %v1309 = vsel %vm51, %v1295, 0
  %v1310 = vsel %vm54, %v1296, 0
  %v1311 = vadd.s32 %v1308, %v1310
  %v1312 = vadd.s32 %v1311, %v1309
  %v1313 = vrot.slane %v1312, 4
  %v1314 = vadd.s32 %v1312, %v1313
  %v1315 = vrot.slane %v1314, 2
  %v1316 = vadd.s32 %v1314, %v1315
  %v1317 = vrot.slane %v1316, 1
  %v1318 = vadd.s32 %v1316, %v1317
  %v1319 = vsub.s32 8, %v1307
  %v1320 = vsub.s32 8, %v1318
  %v1321 = vsub.s32 31, %v27
  %v1322 = vsub.s32 31, %v28
  %v1323 = vsub.s32 31, %v29
  %v1324 = vsel %vm1285, %v1321, 4294967295
  %v1325 = vsel %vm1286, %v1322, 4294967295
  %v1326 = vsel %vm1287, %v1323, 4294967295
  %v1327 = vsel %vm1288, %v1321, 4294967295
  %v1328 = vsel %vm1289, %v1322, 4294967295
  %v1329 = vsel %vm1290, %v1323, 4294967295
  %vm1330 = vcmp.ge.s32.totalorder %v1324, 16
  %vm1331 = vcmp.ge.s32.totalorder %v1325, 16
  %vm1332 = vcmp.ge.s32.totalorder %v1326, 16
  %vm1333 = vcmp.ge.s32.totalorder %v1327, 16
  %vm1334 = vcmp.ge.s32.totalorder %v1328, 16
  %vm1335 = vcmp.ge.s32.totalorder %v1329, 16
  %v1336 = vsel %vm1330, 1, 0
  %v1337 = vsel %vm1331, 1, 0
  %v1338 = vsel %vm1332, 1, 0
  %v1339 = vsel %vm1333, 1, 0
  %v1340 = vsel %vm1334, 1, 0
  %v1341 = vsel %vm1335, 1, 0
  %v1342 = vsel %vm51, %v1336, 0
  %v1343 = vsel %vm51, %v1337, 0
  %v1344 = vsel %vm54, %v1338, 0
  %v1345 = vadd.s32 %v1342, %v1344
  %v1346 = vadd.s32 %v1345, %v1343
  %v1347 = vrot.slane %v1346, 4
  %v1348 = vadd.s32 %v1346, %v1347
  %v1349 = vrot.slane %v1348, 2
  %v1350 = vadd.s32 %v1348, %v1349
  %v1351 = vrot.slane %v1350, 1
  %v1352 = vadd.s32 %v1350, %v1351
  %v1353 = vsel %vm51, %v1339, 0
  %v1354 = vsel %vm51, %v1340, 0
  %v1355 = vsel %vm54, %v1341, 0
  %v1356 = vadd.s32 %v1353, %v1355
  %v1357 = vadd.s32 %v1356, %v1354
  %v1358 = vrot.slane %v1357, 4
  %v1359 = vadd.s32 %v1357, %v1358
  %v1360 = vrot.slane %v1359, 2
  %v1361 = vadd.s32 %v1359, %v1360
  %v1362 = vrot.slane %v1361, 1
  %v1363 = vadd.s32 %v1361, %v1362
  %vm1364 = vcmp.ge.s32.totalorder %v1352, %v1319
  %vm1365 = vcmp.ge.s32.totalorder %v1363, %v1320
  %v1366 = vsel %vm1364, 16, 0
  %v1367 = vsel %vm1365, 16, 0
  %v1368 = vor.u32 %v1366, 8
  %v1369 = vor.u32 %v1367, 8
  %vm1370 = vcmp.ge.s32.totalorder %v1324, %v1368
  %vm1371 = vcmp.ge.s32.totalorder %v1325, %v1368
  %vm1372 = vcmp.ge.s32.totalorder %v1326, %v1368
  %vm1373 = vcmp.ge.s32.totalorder %v1327, %v1369
  %vm1374 = vcmp.ge.s32.totalorder %v1328, %v1369
  %vm1375 = vcmp.ge.s32.totalorder %v1329, %v1369
  %v1376 = vsel %vm1370, 1, 0
  %v1377 = vsel %vm1371, 1, 0
  %v1378 = vsel %vm1372, 1, 0
  %v1379 = vsel %vm1373, 1, 0
  %v1380 = vsel %vm1374, 1, 0
  %v1381 = vsel %vm1375, 1, 0
  %v1382 = vsel %vm51, %v1376, 0
  %v1383 = vsel %vm51, %v1377, 0
  %v1384 = vsel %vm54, %v1378, 0
  %v1385 = vadd.s32 %v1382, %v1384
  %v1386 = vadd.s32 %v1385, %v1383
  %v1387 = vrot.slane %v1386, 4
  %v1388 = vadd.s32 %v1386, %v1387
  %v1389 = vrot.slane %v1388, 2
  %v1390 = vadd.s32 %v1388, %v1389
  %v1391 = vrot.slane %v1390, 1
  %v1392 = vadd.s32 %v1390, %v1391
  %v1393 = vsel %vm51, %v1379, 0
  %v1394 = vsel %vm51, %v1380, 0
  %v1395 = vsel %vm54, %v1381, 0
  %v1396 = vadd.s32 %v1393, %v1395
  %v1397 = vadd.s32 %v1396, %v1394
  %v1398 = vrot.slane %v1397, 4
  %v1399 = vadd.s32 %v1397, %v1398
  %v1400 = vrot.slane %v1399, 2
  %v1401 = vadd.s32 %v1399, %v1400
  %v1402 = vrot.slane %v1401, 1
  %v1403 = vadd.s32 %v1401, %v1402
  %vm1404 = vcmp.ge.s32.totalorder %v1392, %v1319
  %vm1405 = vcmp.ge.s32.totalorder %v1403, %v1320
  %v1406 = vsel %vm1404, %v1368, %v1366
  %v1407 = vsel %vm1405, %v1369, %v1367
  %v1408 = vor.u32 %v1406, 4
  %v1409 = vor.u32 %v1407, 4
  %vm1410 = vcmp.ge.s32.totalorder %v1324, %v1408
  %vm1411 = vcmp.ge.s32.totalorder %v1325, %v1408
  %vm1412 = vcmp.ge.s32.totalorder %v1326, %v1408
  %vm1413 = vcmp.ge.s32.totalorder %v1327, %v1409
  %vm1414 = vcmp.ge.s32.totalorder %v1328, %v1409
  %vm1415 = vcmp.ge.s32.totalorder %v1329, %v1409
  %v1416 = vsel %vm1410, 1, 0
  %v1417 = vsel %vm1411, 1, 0
  %v1418 = vsel %vm1412, 1, 0
  %v1419 = vsel %vm1413, 1, 0
  %v1420 = vsel %vm1414, 1, 0
  %v1421 = vsel %vm1415, 1, 0
  %v1422 = vsel %vm51, %v1416, 0
  %v1423 = vsel %vm51, %v1417, 0
  %v1424 = vsel %vm54, %v1418, 0
  %v1425 = vadd.s32 %v1422, %v1424
  %v1426 = vadd.s32 %v1425, %v1423
  %v1427 = vrot.slane %v1426, 4
  %v1428 = vadd.s32 %v1426, %v1427
  %v1429 = vrot.slane %v1428, 2
  %v1430 = vadd.s32 %v1428, %v1429
  %v1431 = vrot.slane %v1430, 1
  %v1432 = vadd.s32 %v1430, %v1431
  %v1433 = vsel %vm51, %v1419, 0
  %v1434 = vsel %vm51, %v1420, 0
  %v1435 = vsel %vm54, %v1421, 0
  %v1436 = vadd.s32 %v1433, %v1435
  %v1437 = vadd.s32 %v1436, %v1434
  %v1438 = vrot.slane %v1437, 4
  %v1439 = vadd.s32 %v1437, %v1438
  %v1440 = vrot.slane %v1439, 2
  %v1441 = vadd.s32 %v1439, %v1440
  %v1442 = vrot.slane %v1441, 1
  %v1443 = vadd.s32 %v1441, %v1442
  %vm1444 = vcmp.ge.s32.totalorder %v1432, %v1319
  %vm1445 = vcmp.ge.s32.totalorder %v1443, %v1320
  %v1446 = vsel %vm1444, %v1408, %v1406
  %v1447 = vsel %vm1445, %v1409, %v1407
  %v1448 = vor.u32 %v1446, 2
  %v1449 = vor.u32 %v1447, 2
  %vm1450 = vcmp.ge.s32.totalorder %v1324, %v1448
  %vm1451 = vcmp.ge.s32.totalorder %v1325, %v1448
  %vm1452 = vcmp.ge.s32.totalorder %v1326, %v1448
  %vm1453 = vcmp.ge.s32.totalorder %v1327, %v1449
  %vm1454 = vcmp.ge.s32.totalorder %v1328, %v1449
  %vm1455 = vcmp.ge.s32.totalorder %v1329, %v1449
  %v1456 = vsel %vm1450, 1, 0
  %v1457 = vsel %vm1451, 1, 0
  %v1458 = vsel %vm1452, 1, 0
  %v1459 = vsel %vm1453, 1, 0
  %v1460 = vsel %vm1454, 1, 0
  %v1461 = vsel %vm1455, 1, 0
  %v1462 = vsel %vm51, %v1456, 0
  %v1463 = vsel %vm51, %v1457, 0
  %v1464 = vsel %vm54, %v1458, 0
  %v1465 = vadd.s32 %v1462, %v1464
  %v1466 = vadd.s32 %v1465, %v1463
  %v1467 = vrot.slane %v1466, 4
  %v1468 = vadd.s32 %v1466, %v1467
  %v1469 = vrot.slane %v1468, 2
  %v1470 = vadd.s32 %v1468, %v1469
  %v1471 = vrot.slane %v1470, 1
  %v1472 = vadd.s32 %v1470, %v1471
  %v1473 = vsel %vm51, %v1459, 0
  %v1474 = vsel %vm51, %v1460, 0
  %v1475 = vsel %vm54, %v1461, 0
  %v1476 = vadd.s32 %v1473, %v1475
  %v1477 = vadd.s32 %v1476, %v1474
  %v1478 = vrot.slane %v1477, 4
  %v1479 = vadd.s32 %v1477, %v1478
  %v1480 = vrot.slane %v1479, 2
  %v1481 = vadd.s32 %v1479, %v1480
  %v1482 = vrot.slane %v1481, 1
  %v1483 = vadd.s32 %v1481, %v1482
  %vm1484 = vcmp.ge.s32.totalorder %v1472, %v1319
  %vm1485 = vcmp.ge.s32.totalorder %v1483, %v1320
  %v1486 = vsel %vm1484, %v1448, %v1446
  %v1487 = vsel %vm1485, %v1449, %v1447
  %v1488 = vor.u32 %v1486, 1
  %v1489 = vor.u32 %v1487, 1
  %vm1490 = vcmp.ge.s32.totalorder %v1324, %v1488
  %vm1491 = vcmp.ge.s32.totalorder %v1325, %v1488
  %vm1492 = vcmp.ge.s32.totalorder %v1326, %v1488
  %vm1493 = vcmp.ge.s32.totalorder %v1327, %v1489
  %vm1494 = vcmp.ge.s32.totalorder %v1328, %v1489
  %vm1495 = vcmp.ge.s32.totalorder %v1329, %v1489
  %v1496 = vsel %vm1490, 1, 0
  %v1497 = vsel %vm1491, 1, 0
  %v1498 = vsel %vm1492, 1, 0
  %v1499 = vsel %vm1493, 1, 0
  %v1500 = vsel %vm1494, 1, 0
  %v1501 = vsel %vm1495, 1, 0
  %v1502 = vsel %vm51, %v1496, 0
  %v1503 = vsel %vm51, %v1497, 0
  %v1504 = vsel %vm54, %v1498, 0
  %v1505 = vadd.s32 %v1502, %v1504
  %v1506 = vadd.s32 %v1505, %v1503
  %v1507 = vrot.slane %v1506, 4
  %v1508 = vadd.s32 %v1506, %v1507
  %v1509 = vrot.slane %v1508, 2
  %v1510 = vadd.s32 %v1508, %v1509
  %v1511 = vrot.slane %v1510, 1
  %v1512 = vadd.s32 %v1510, %v1511
  %v1513 = vsel %vm51, %v1499, 0
  %v1514 = vsel %vm51, %v1500, 0
  %v1515 = vsel %vm54, %v1501, 0
  %v1516 = vadd.s32 %v1513, %v1515
  %v1517 = vadd.s32 %v1516, %v1514
  %v1518 = vrot.slane %v1517, 4
  %v1519 = vadd.s32 %v1517, %v1518
  %v1520 = vrot.slane %v1519, 2
  %v1521 = vadd.s32 %v1519, %v1520
  %v1522 = vrot.slane %v1521, 1
  %v1523 = vadd.s32 %v1521, %v1522
  %vm1524 = vcmp.ge.s32.totalorder %v1512, %v1319
  %vm1525 = vcmp.ge.s32.totalorder %v1523, %v1320
  %v1526 = vsel %vm1524, %v1488, %v1486
  %v1527 = vsel %vm1525, %v1489, %v1487
  %vm1528 = vmor %vm30, %vm1279
  %vm1529 = vmor %vm31, %vm1280
  %vm1530 = vmor %vm32, %vm1281
  %vm1531 = vmor %vm30, %vm1282
  %vm1532 = vmor %vm31, %vm1283
  %vm1533 = vmor %vm32, %vm1284
  %vm1534 = vcmp.ge.s32.totalorder %v1324, %v1526
  %vm1535 = vcmp.ge.s32.totalorder %v1325, %v1526
  %vm1536 = vcmp.ge.s32.totalorder %v1326, %v1526
  %vm1537 = vcmp.ge.s32.totalorder %v1327, %v1527
  %vm1538 = vcmp.ge.s32.totalorder %v1328, %v1527
  %vm1539 = vcmp.ge.s32.totalorder %v1329, %v1527
  %vm1540 = vmand %vm1285, %vm1534
  %vm1541 = vmand %vm1286, %vm1535
  %vm1542 = vmand %vm1287, %vm1536
  %vm1543 = vmand %vm1288, %vm1537
  %vm1544 = vmand %vm1289, %vm1538
  %vm1545 = vmand %vm1290, %vm1539
  %vm1546 = vmor %vm1528, %vm1540
  %vm1547 = vmor %vm1529, %vm1541
  %vm1548 = vmor %vm1530, %vm1542
  %vm1549 = vmor %vm1531, %vm1543
  %vm1550 = vmor %vm1532, %vm1544
  %vm1551 = vmor %vm1533, %vm1545
  %v1552 = vsel %vm1546, %v8, 0.0
  %v1553 = vsel %vm1547, %v9, 0.0
  %v1554 = vsel %vm1548, %v10, 0.0
  %v1555 = vsel %vm1549, %v11, 0.0
  %v1556 = vsel %vm1550, %v12, 0.0
  %v1557 = vsel %vm1551, %v13, 0.0
  %1558 = vst.msk [vmem:[%s1] sm:$0xff] %vm51, %v1552
  %1559 = vst.msk [vmem:[%s1 + $0x8] sm:$0xff] %vm51, %v1553
  %1560 = vst.msk [vmem:[%s1 + $0x10] sm:$0x1] %vm54, %v1554
  %1561 = vst.msk [vmem:[%s1 + $0x18] sm:$0xff] %vm51, %v1555
  %1562 = vst.msk [vmem:[%s1 + $0x20] sm:$0xff] %vm51, %v1556
  %1563 = vst.msk [vmem:[%s1 + $0x28] sm:$0x1] %vm54, %v1557
  // Predicated region
  $region6: #{tpu_custom_call.1} parent=0 // pred_check
    _
  $region7: #{tpu_custom_call.1} parent=0 // pred_check_branch
    %1565 = sbr.rel (0) target = $region9
  $region8: #{tpu_custom_call.1} parent=0 // pred_region
    _
  $region9: #{tpu_custom_call.1} parent=0 // pred_fallthru
    _
  // Predicated region
  $region10: #{tpu_custom_call.1} parent=0 // pred_check
    _
  $region11: #{tpu_custom_call.1} parent=0 // pred_check_branch
    %1567 = sbr.rel (0) target = $region13
  $region12: #{tpu_custom_call.1} parent=0 // pred_region
    _
  $region13: #{tpu_custom_call.1} parent=0 // pred_fallthru
    _

</llo_original>
